<compile_context>
chip_gen: v7x
topology: tpu7x:2x2x1
jax: 0.10.0
libtpu: 0.0.40
codegen_flags: <defaults>
</compile_context>

<pallas_src>
import functools

import jax
import jax.numpy as jnp
from jax.experimental import pallas as pl
from jax.experimental.pallas import tpu as pltpu


def _round_up(x, m):
    return ((x + m - 1) // m) * m


def _gated_equiv_kernel(x_ref, v_ref, w12_ref, wu1x_ref, wu1v_ref, bu1_ref,
                        wu2x_ref, wu2g_ref, bu2x_ref, bu2g_ref,
                        xo_ref, vo_ref,
                        *, hidden, out_ch, scalar_activation, compute_dtype):
    """One grid step over a tile of TN nodes. Feature dims are untiled."""
    # ---- vector branch: per-spatial-slice dot against fused [W1 | W2] -------
    vf = v_ref[...].astype(compute_dtype)                      # (TN, 3H)
    w12 = w12_ref[...]                                         # (H, H+O)
    sq_acc = None
    vec2 = []
    for d in range(3):
        vd = vf[:, d * hidden:(d + 1) * hidden]                # (TN, H)
        pd = jnp.dot(vd, w12, preferred_element_type=jnp.float32)  # (TN, H+O) f32
        p1 = pd[:, :hidden]
        vec2.append(pd[:, hidden:])                            # (TN, O) f32
        sq = p1 * p1
        sq_acc = sq if sq_acc is None else sq_acc + sq
    # vec1 = || v @ W1 ||_2 over the spatial axis (torch.norm(dim=-2), no eps)
    vec1 = jnp.sqrt(sq_acc)                                    # (TN, H) f32

    # ---- update_net: Linear(2H -> I) + SiLU + Linear(I -> 2O) ---------------
    # Both weight matrices are pre-split so no lane concat / slice is needed.
    xc = x_ref[...].astype(compute_dtype)
    u = (jnp.dot(xc, wu1x_ref[...], preferred_element_type=jnp.float32)
         + jnp.dot(vec1.astype(compute_dtype), wu1v_ref[...],
                   preferred_element_type=jnp.float32)
         + bu1_ref[...])
    u = u * jax.nn.sigmoid(u)                                  # SiLU (f32)
    uc = u.astype(compute_dtype)
    x_out = (jnp.dot(uc, wu2x_ref[...], preferred_element_type=jnp.float32)
             + bu2x_ref[...])                                  # (TN, O)
    gate = (jnp.dot(uc, wu2g_ref[...], preferred_element_type=jnp.float32)
            + bu2g_ref[...])                                   # (TN, O)

    if scalar_activation:
        x_out = x_out * jax.nn.sigmoid(x_out)
    xo_ref[...] = x_out.astype(xo_ref.dtype)

    # Gated vector branch: write each spatial slice directly into the output block.
    for d in range(3):
        vo_ref[:, d * out_ch:(d + 1) * out_ch] = (gate * vec2[d]).astype(vo_ref.dtype)


def prepare_params(params, *, hidden, out_channels, compute_dtype=jnp.float32):
    """One-time weight prep (cast / split / fuse); call once, reuse per forward."""
    w1, w2, wu1, bu1, wu2, bu2 = params
    o = out_channels
    # Fused vector-branch RHS: one dot per spatial slice yields [p1 | vec2].
    w12 = jnp.concatenate([w1, w2], axis=1).astype(compute_dtype)    # (H, H+O)
    # update_net[0] split along its input rows (x rows / vec1 rows): no concat.
    wu1x = wu1[:hidden].astype(compute_dtype)                        # (H, I)
    wu1v = wu1[hidden:].astype(compute_dtype)                        # (H, I)
    bu1f = bu1.reshape(1, -1).astype(jnp.float32)                    # (1, I)
    # update_net[2] split along its output columns (x half / gate half): no slice.
    wu2x = wu2[:, :o].astype(compute_dtype)                          # (I, O)
    wu2g = wu2[:, o:].astype(compute_dtype)                          # (I, O)
    bu2f = bu2.reshape(1, -1).astype(jnp.float32)
    bu2x = bu2f[:, :o]                                               # (1, O)
    bu2g = bu2f[:, o:]                                               # (1, O)
    return (w12, wu1x, wu1v, bu1f, wu2x, wu2g, bu2x, bu2g)


def gated_equivariant_block(x, v, prepared, *, out_channels, scalar_activation=False,
                            tile_n=None, compute_dtype=jnp.float32,
                            vmem_limit_bytes=48 * 1024 * 1024):
    """x: (N, H), v: (N, 3, H). Returns (x_out (N, O), v_out (N, 3, O)).

    `prepared` comes from prepare_params().  vmem_limit_bytes defaults to
    48 MiB (v7x-safe); on v5e/v6e it can be raised toward ~96-112 MiB together
    with a larger tile_n.
    """
    n, hidden = x.shape
    assert v.shape == (n, 3, hidden)
    w12, wu1x, wu1v, bu1f, wu2x, wu2g, bu2x, bu2g = prepared
    inter = wu1x.shape[1]
    o = out_channels

    # Tile size: aim for ~8 roughly even grid steps (v7x megacore sharding +
    # DMA pipelining on all gens), clamped to [16, 512], 16-aligned so bf16
    # sublane tiles stay native.
    if tile_n is None:
        tile_n = min(512, max(16, _round_up(pl.cdiv(n, 8), 16)))
    tile_n = max(16, _round_up(tile_n, 16))

    # Free row-major collapse (no HBM pass): (N, 3, H) -> (N, 3H).
    v_flat = v.reshape(n, 3 * hidden)

    kernel = functools.partial(
        _gated_equiv_kernel, hidden=hidden, out_ch=o,
        scalar_activation=scalar_activation, compute_dtype=compute_dtype)

    def _const(i):
        return (0, 0)

    def _wspec(shape):
        # Grid-invariant weights/biases: single-buffer to save VMEM (v7x).
        return pl.BlockSpec(shape, _const, pipeline_mode=pl.Buffered(1))

    grid = (pl.cdiv(n, tile_n),)   # ragged last block: output stores masked by Pallas
    x_out, v_out_flat = pl.pallas_call(
        kernel,
        out_shape=(
            jax.ShapeDtypeStruct((n, o), x.dtype),
            jax.ShapeDtypeStruct((n, 3 * o), v.dtype),
        ),
        grid=grid,
        in_specs=[
            pl.BlockSpec((tile_n, hidden), lambda i: (i, 0)),       # x tile
            pl.BlockSpec((tile_n, 3 * hidden), lambda i: (i, 0)),   # v tile (N,3H view)
            _wspec((hidden, hidden + o)),                           # [W1 | W2]
            _wspec((hidden, inter)),                                # Wu1 (x rows)
            _wspec((hidden, inter)),                                # Wu1 (vec1 rows)
            _wspec((1, inter)),                                     # b1
            _wspec((inter, o)),                                     # Wu2 (x half)
            _wspec((inter, o)),                                     # Wu2 (gate half)
            _wspec((1, o)),                                         # b2 (x half)
            _wspec((1, o)),                                         # b2 (gate half)
        ],
        out_specs=(
            pl.BlockSpec((tile_n, o), lambda i: (i, 0)),
            pl.BlockSpec((tile_n, 3 * o), lambda i: (i, 0)),
        ),
        compiler_params=pltpu.CompilerParams(
            dimension_semantics=("parallel",),
            vmem_limit_bytes=vmem_limit_bytes),
    )(x, v_flat, w12, wu1x, wu1v, bu1f, wu2x, wu2g, bu2x, bu2g)

    v_out = v_out_flat.reshape(n, 3, o)   # free reshape back to (N, 3, O)
    return x_out, v_out


# --------------------------- parameters / reference ---------------------------

def _xavier_uniform(key, fan_in, fan_out, dtype=jnp.float32):
    limit = jnp.sqrt(6.0 / (fan_in + fan_out))
    return jax.random.uniform(key, (fan_in, fan_out), dtype, -limit, limit)


def make_params(key, hidden, out_channels, intermediate=None):
    if intermediate is None:
        intermediate = hidden
    k1, k2, k3, k4 = jax.random.split(key, 4)
    # Stored pre-transposed: linear(x) == x @ W
    w1 = _xavier_uniform(k1, hidden, hidden)                    # vec1_proj (no bias)
    w2 = _xavier_uniform(k2, hidden, out_channels)              # vec2_proj (no bias)
    wu1 = _xavier_uniform(k3, 2 * hidden, intermediate)         # update_net[0]
    bu1 = jnp.zeros((1, intermediate), jnp.float32)
    wu2 = _xavier_uniform(k4, intermediate, 2 * out_channels)   # update_net[2]
    bu2 = jnp.zeros((1, 2 * out_channels), jnp.float32)
    return (w1, w2, wu1, bu1, wu2, bu2)


def _reference(x, v, params, out_channels, scalar_activation=False):
    """Pure-JAX reference mirroring the PyTorch forward."""
    w1, w2, wu1, bu1, wu2, bu2 = params
    vec1 = jnp.linalg.norm(jnp.einsum('nsh,hk->nsk', v, w1), axis=-2)
    vec2 = jnp.einsum('nsh,ho->nso', v, w2)
    h = jnp.concatenate([x, vec1], axis=-1)
    u = h @ wu1 + bu1[0]
    u = u * jax.nn.sigmoid(u)
    u2 = u @ wu2 + bu2[0]
    x_out, gate = u2[:, :out_channels], u2[:, out_channels:]
    v_out = gate[:, None, :] * vec2
    if scalar_activation:
        x_out = x_out * jax.nn.sigmoid(x_out)
    return x_out, v_out


if __name__ == "__main__":
    N, HIDDEN, OUT = 72, 32, 16     # ragged N -> exercises the masked last block

    key = jax.random.PRNGKey(0)
    kx, kv, kp = jax.random.split(key, 3)
    x = jax.random.normal(kx, (N, HIDDEN), jnp.float32)
    v = jax.random.normal(kv, (N, 3, HIDDEN), jnp.float32)
    params = make_params(kp, HIDDEN, OUT)

    # ---- f32 MXU path: exact check against the reference ----
    prep_f32 = prepare_params(params, hidden=HIDDEN, out_channels=OUT,
                              compute_dtype=jnp.float32)
    x_out, v_out = gated_equivariant_block(
        x, v, prep_f32, out_channels=OUT, scalar_activation=False,
        tile_n=16, compute_dtype=jnp.float32)
    jax.block_until_ready((x_out, v_out))
    x_r, v_r = _reference(x, v, params, OUT, scalar_activation=False)
    assert x_out.shape == (N, OUT) and v_out.shape == (N, 3, OUT)
    assert jnp.allclose(x_out, x_r, atol=1e-4, rtol=1e-4)
    assert jnp.allclose(v_out, v_r, atol=1e-4, rtol=1e-4)

    # ---- bf16 MXU path (f32 accumulation): loose check vs bf16-quantized ref ----
    prep_bf16 = prepare_params(params, hidden=HIDDEN, out_channels=OUT,
                               compute_dtype=jnp.bfloat16)
    x_out_b, v_out_b = gated_equivariant_block(
        x, v, prep_bf16, out_channels=OUT, scalar_activation=True,
        tile_n=16, compute_dtype=jnp.bfloat16)
    jax.block_until_ready((x_out_b, v_out_b))

    def _q(a):
        return a.astype(jnp.bfloat16).astype(jnp.float32)

    params_q = tuple(_q(p) for p in params)
    x_rb, v_rb = _reference(_q(x), _q(v), params_q, OUT, scalar_activation=True)
    assert jnp.allclose(x_out_b, x_rb, atol=5e-2, rtol=5e-2)
    assert jnp.allclose(v_out_b, v_rb, atol=5e-2, rtol=5e-2)

    print("KERNEL_OK")
</pallas_src>

<mosaic_0001>
module attributes {stable_mosaic.version = 11 : i64} {
  func.func @_gated_equiv_kernel(%arg0: i32, %arg1: memref<16x32xf32, #tpu.memory_space<vmem>>, %arg2: memref<16x96xf32, #tpu.memory_space<vmem>>, %arg3: memref<32x48xf32, #tpu.memory_space<vmem>>, %arg4: memref<32x32xf32, #tpu.memory_space<vmem>>, %arg5: memref<32x32xf32, #tpu.memory_space<vmem>>, %arg6: memref<1x32xf32, #tpu.memory_space<vmem>>, %arg7: memref<32x16xf32, #tpu.memory_space<vmem>>, %arg8: memref<32x16xf32, #tpu.memory_space<vmem>>, %arg9: memref<1x16xf32, #tpu.memory_space<vmem>>, %arg10: memref<1x16xf32, #tpu.memory_space<vmem>>, %arg11: memref<16x16xf32, #tpu.memory_space<vmem>>, %arg12: memref<16x48xf32, #tpu.memory_space<vmem>>) attributes {dimension_semantics = [#tpu.dimension_semantics<parallel>], iteration_bounds = array<i64: 5>, scalar_prefetch = 0 : i64, scratch_operands = 0 : i64, tpu.core_type = #tpu.core_type<tc>, window_params = [{transform_indices = @transform_0, window_bounds = array<i64: 16, 32>}, {transform_indices = @transform_1, window_bounds = array<i64: 16, 96>}, {pipeline_mode = #tpu.pipeline_mode<synchronous>, transform_indices = @transform_2, window_bounds = array<i64: 32, 48>}, {pipeline_mode = #tpu.pipeline_mode<synchronous>, transform_indices = @transform_3, window_bounds = array<i64: 32, 32>}, {pipeline_mode = #tpu.pipeline_mode<synchronous>, transform_indices = @transform_4, window_bounds = array<i64: 32, 32>}, {pipeline_mode = #tpu.pipeline_mode<synchronous>, transform_indices = @transform_5, window_bounds = array<i64: 1, 32>}, {pipeline_mode = #tpu.pipeline_mode<synchronous>, transform_indices = @transform_6, window_bounds = array<i64: 32, 16>}, {pipeline_mode = #tpu.pipeline_mode<synchronous>, transform_indices = @transform_7, window_bounds = array<i64: 32, 16>}, {pipeline_mode = #tpu.pipeline_mode<synchronous>, transform_indices = @transform_8, window_bounds = array<i64: 1, 16>}, {pipeline_mode = #tpu.pipeline_mode<synchronous>, transform_indices = @transform_9, window_bounds = array<i64: 1, 16>}, {transform_indices = @transform_10, window_bounds = array<i64: 16, 16>}, {transform_indices = @transform_11, window_bounds = array<i64: 16, 48>}]} {
    %c0 = arith.constant 0 : index
    %c0_0 = arith.constant 0 : index
    %0 = vector.load %arg2[%c0, %c0_0] : memref<16x96xf32, #tpu.memory_space<vmem>>, vector<16x96xf32>
    %c0_1 = arith.constant 0 : index
    %c0_2 = arith.constant 0 : index
    %1 = vector.load %arg3[%c0_1, %c0_2] : memref<32x48xf32, #tpu.memory_space<vmem>>, vector<32x48xf32>
    %2 = vector.extract_strided_slice %0 {offsets = [0, 0], sizes = [16, 32], strides = [1, 1]} : vector<16x96xf32> to vector<16x32xf32>
    %cst = arith.constant dense<0.000000e+00> : vector<16x48xf32>
    %3 = tpu.matmul %2, %1, %cst {dimension_numbers = #tpu.dot_dimension_numbers<[1], [0], [0], [1], [0, 0, 1, 1], [], []>} : vector<16x32xf32>, vector<32x48xf32>, vector<16x48xf32> -> vector<16x48xf32>
    %4 = vector.extract_strided_slice %3 {offsets = [0, 0], sizes = [16, 32], strides = [1, 1]} : vector<16x48xf32> to vector<16x32xf32>
    %5 = vector.extract_strided_slice %3 {offsets = [0, 32], sizes = [16, 16], strides = [1, 1]} : vector<16x48xf32> to vector<16x16xf32>
    %6 = arith.mulf %4, %4 : vector<16x32xf32>
    %7 = vector.extract_strided_slice %0 {offsets = [0, 32], sizes = [16, 32], strides = [1, 1]} : vector<16x96xf32> to vector<16x32xf32>
    %cst_3 = arith.constant dense<0.000000e+00> : vector<16x48xf32>
    %8 = tpu.matmul %7, %1, %cst_3 {dimension_numbers = #tpu.dot_dimension_numbers<[1], [0], [0], [1], [0, 0, 1, 1], [], []>} : vector<16x32xf32>, vector<32x48xf32>, vector<16x48xf32> -> vector<16x48xf32>
    %9 = vector.extract_strided_slice %8 {offsets = [0, 0], sizes = [16, 32], strides = [1, 1]} : vector<16x48xf32> to vector<16x32xf32>
    %10 = vector.extract_strided_slice %8 {offsets = [0, 32], sizes = [16, 16], strides = [1, 1]} : vector<16x48xf32> to vector<16x16xf32>
    %11 = arith.mulf %9, %9 : vector<16x32xf32>
    %12 = arith.addf %6, %11 : vector<16x32xf32>
    %13 = vector.extract_strided_slice %0 {offsets = [0, 64], sizes = [16, 32], strides = [1, 1]} : vector<16x96xf32> to vector<16x32xf32>
    %cst_4 = arith.constant dense<0.000000e+00> : vector<16x48xf32>
    %14 = tpu.matmul %13, %1, %cst_4 {dimension_numbers = #tpu.dot_dimension_numbers<[1], [0], [0], [1], [0, 0, 1, 1], [], []>} : vector<16x32xf32>, vector<32x48xf32>, vector<16x48xf32> -> vector<16x48xf32>
    %15 = vector.extract_strided_slice %14 {offsets = [0, 0], sizes = [16, 32], strides = [1, 1]} : vector<16x48xf32> to vector<16x32xf32>
    %16 = vector.extract_strided_slice %14 {offsets = [0, 32], sizes = [16, 16], strides = [1, 1]} : vector<16x48xf32> to vector<16x16xf32>
    %17 = arith.mulf %15, %15 : vector<16x32xf32>
    %18 = arith.addf %12, %17 : vector<16x32xf32>
    %19 = math.sqrt %18 : vector<16x32xf32>
    %c0_5 = arith.constant 0 : index
    %c0_6 = arith.constant 0 : index
    %20 = vector.load %arg1[%c0_5, %c0_6] : memref<16x32xf32, #tpu.memory_space<vmem>>, vector<16x32xf32>
    %c0_7 = arith.constant 0 : index
    %c0_8 = arith.constant 0 : index
    %21 = vector.load %arg4[%c0_7, %c0_8] : memref<32x32xf32, #tpu.memory_space<vmem>>, vector<32x32xf32>
    %cst_9 = arith.constant dense<0.000000e+00> : vector<16x32xf32>
    %22 = tpu.matmul %20, %21, %cst_9 {dimension_numbers = #tpu.dot_dimension_numbers<[1], [0], [0], [1], [0, 0, 1, 1], [], []>} : vector<16x32xf32>, vector<32x32xf32>, vector<16x32xf32> -> vector<16x32xf32>
    %c0_10 = arith.constant 0 : index
    %c0_11 = arith.constant 0 : index
    %23 = vector.load %arg5[%c0_10, %c0_11] : memref<32x32xf32, #tpu.memory_space<vmem>>, vector<32x32xf32>
    %cst_12 = arith.constant dense<0.000000e+00> : vector<16x32xf32>
    %24 = tpu.matmul %19, %23, %cst_12 {dimension_numbers = #tpu.dot_dimension_numbers<[1], [0], [0], [1], [0, 0, 1, 1], [], []>} : vector<16x32xf32>, vector<32x32xf32>, vector<16x32xf32> -> vector<16x32xf32>
    %25 = arith.addf %22, %24 : vector<16x32xf32>
    %c0_13 = arith.constant 0 : index
    %c0_14 = arith.constant 0 : index
    %26 = vector.load %arg6[%c0_13, %c0_14] : memref<1x32xf32, #tpu.memory_space<vmem>>, vector<1x32xf32>
    %27 = vector.broadcast %26 : vector<1x32xf32> to vector<16x32xf32>
    %28 = arith.addf %25, %27 : vector<16x32xf32>
    %29 = arith.negf %28 : vector<16x32xf32>
    %30 = math.exp %29 : vector<16x32xf32>
    %cst_15 = arith.constant 1.000000e+00 : f32
    %31 = vector.broadcast %cst_15 : f32 to vector<16x32xf32>
    %32 = arith.addf %31, %30 : vector<16x32xf32>
    %33 = arith.divf %31, %32 : vector<16x32xf32>
    %34 = arith.mulf %28, %33 : vector<16x32xf32>
    %c0_16 = arith.constant 0 : index
    %c0_17 = arith.constant 0 : index
    %35 = vector.load %arg7[%c0_16, %c0_17] : memref<32x16xf32, #tpu.memory_space<vmem>>, vector<32x16xf32>
    %cst_18 = arith.constant dense<0.000000e+00> : vector<16x16xf32>
    %36 = tpu.matmul %34, %35, %cst_18 {dimension_numbers = #tpu.dot_dimension_numbers<[1], [0], [0], [1], [0, 0, 1, 1], [], []>} : vector<16x32xf32>, vector<32x16xf32>, vector<16x16xf32> -> vector<16x16xf32>
    %c0_19 = arith.constant 0 : index
    %c0_20 = arith.constant 0 : index
    %37 = vector.load %arg9[%c0_19, %c0_20] : memref<1x16xf32, #tpu.memory_space<vmem>>, vector<1x16xf32>
    %38 = vector.broadcast %37 : vector<1x16xf32> to vector<16x16xf32>
    %39 = arith.addf %36, %38 : vector<16x16xf32>
    %c0_21 = arith.constant 0 : index
    %c0_22 = arith.constant 0 : index
    %40 = vector.load %arg8[%c0_21, %c0_22] : memref<32x16xf32, #tpu.memory_space<vmem>>, vector<32x16xf32>
    %cst_23 = arith.constant dense<0.000000e+00> : vector<16x16xf32>
    %41 = tpu.matmul %34, %40, %cst_23 {dimension_numbers = #tpu.dot_dimension_numbers<[1], [0], [0], [1], [0, 0, 1, 1], [], []>} : vector<16x32xf32>, vector<32x16xf32>, vector<16x16xf32> -> vector<16x16xf32>
    %c0_24 = arith.constant 0 : index
    %c0_25 = arith.constant 0 : index
    %42 = vector.load %arg10[%c0_24, %c0_25] : memref<1x16xf32, #tpu.memory_space<vmem>>, vector<1x16xf32>
    %43 = vector.broadcast %42 : vector<1x16xf32> to vector<16x16xf32>
    %44 = arith.addf %41, %43 : vector<16x16xf32>
    %c0_26 = arith.constant 0 : index
    %c0_27 = arith.constant 0 : index
    %45 = vector.load %arg11[%c0_26, %c0_27] : memref<16x16xf32, #tpu.memory_space<vmem>>, vector<16x16xf32>
    tpu.vector_store %arg11[%c0_26, %c0_27], %39 {strides = array<i32>} : memref<16x16xf32, #tpu.memory_space<vmem>>, vector<16x16xf32>,
    %46 = arith.mulf %44, %5 : vector<16x16xf32>
    %c0_28 = arith.constant 0 : index
    %c0_29 = arith.constant 0 : index
    %47 = vector.load %arg12[%c0_28, %c0_29] : memref<16x48xf32, #tpu.memory_space<vmem>>, vector<16x16xf32>
    tpu.vector_store %arg12[%c0_28, %c0_29], %46 {strides = array<i32>} : memref<16x48xf32, #tpu.memory_space<vmem>>, vector<16x16xf32>,
    %48 = arith.mulf %44, %10 : vector<16x16xf32>
    %c0_30 = arith.constant 0 : index
    %c16 = arith.constant 16 : index
    %49 = vector.load %arg12[%c0_30, %c16] : memref<16x48xf32, #tpu.memory_space<vmem>>, vector<16x16xf32>
    tpu.vector_store %arg12[%c0_30, %c16], %48 {strides = array<i32>} : memref<16x48xf32, #tpu.memory_space<vmem>>, vector<16x16xf32>,
    %50 = arith.mulf %44, %16 : vector<16x16xf32>
    %c0_31 = arith.constant 0 : index
    %c32 = arith.constant 32 : index
    %51 = vector.load %arg12[%c0_31, %c32] : memref<16x48xf32, #tpu.memory_space<vmem>>, vector<16x16xf32>
    tpu.vector_store %arg12[%c0_31, %c32], %50 {strides = array<i32>} : memref<16x48xf32, #tpu.memory_space<vmem>>, vector<16x16xf32>,
    return
  }
  func.func @transform_0(%arg0: i32) -> (i32, i32) {
    %c0_i32 = arith.constant 0 : i32
    %c0_i32_0 = arith.constant 0 : i32
    return %arg0, %c0_i32 : i32, i32
  }
  func.func @transform_1(%arg0: i32) -> (i32, i32) {
    %c0_i32 = arith.constant 0 : i32
    %c0_i32_0 = arith.constant 0 : i32
    return %arg0, %c0_i32 : i32, i32
  }
  func.func @transform_2(%arg0: i32) -> (i32, i32) {
    %c0_i32 = arith.constant 0 : i32
    %c0_i32_0 = arith.constant 0 : i32
    %c0_i32_1 = arith.constant 0 : i32
    return %c0_i32, %c0_i32_0 : i32, i32
  }
  func.func @transform_3(%arg0: i32) -> (i32, i32) {
    %c0_i32 = arith.constant 0 : i32
    %c0_i32_0 = arith.constant 0 : i32
    %c0_i32_1 = arith.constant 0 : i32
    return %c0_i32, %c0_i32_0 : i32, i32
  }
  func.func @transform_4(%arg0: i32) -> (i32, i32) {
    %c0_i32 = arith.constant 0 : i32
    %c0_i32_0 = arith.constant 0 : i32
    %c0_i32_1 = arith.constant 0 : i32
    return %c0_i32, %c0_i32_0 : i32, i32
  }
  func.func @transform_5(%arg0: i32) -> (i32, i32) {
    %c0_i32 = arith.constant 0 : i32
    %c0_i32_0 = arith.constant 0 : i32
    %c0_i32_1 = arith.constant 0 : i32
    return %c0_i32, %c0_i32_0 : i32, i32
  }
  func.func @transform_6(%arg0: i32) -> (i32, i32) {
    %c0_i32 = arith.constant 0 : i32
    %c0_i32_0 = arith.constant 0 : i32
    %c0_i32_1 = arith.constant 0 : i32
    return %c0_i32, %c0_i32_0 : i32, i32
  }
  func.func @transform_7(%arg0: i32) -> (i32, i32) {
    %c0_i32 = arith.constant 0 : i32
    %c0_i32_0 = arith.constant 0 : i32
    %c0_i32_1 = arith.constant 0 : i32
    return %c0_i32, %c0_i32_0 : i32, i32
  }
  func.func @transform_8(%arg0: i32) -> (i32, i32) {
    %c0_i32 = arith.constant 0 : i32
    %c0_i32_0 = arith.constant 0 : i32
    %c0_i32_1 = arith.constant 0 : i32
    return %c0_i32, %c0_i32_0 : i32, i32
  }
  func.func @transform_9(%arg0: i32) -> (i32, i32) {
    %c0_i32 = arith.constant 0 : i32
    %c0_i32_0 = arith.constant 0 : i32
    %c0_i32_1 = arith.constant 0 : i32
    return %c0_i32, %c0_i32_0 : i32, i32
  }
  func.func @transform_10(%arg0: i32) -> (i32, i32) {
    %c0_i32 = arith.constant 0 : i32
    %c0_i32_0 = arith.constant 0 : i32
    return %arg0, %c0_i32 : i32, i32
  }
  func.func @transform_11(%arg0: i32) -> (i32, i32) {
    %c0_i32 = arith.constant 0 : i32
    %c0_i32_0 = arith.constant 0 : i32
    return %arg0, %c0_i32 : i32, i32
  }
}

</mosaic_0001>

<llo_original>
// kernel: tpu_custom_call.1
$region0: #{tpu_custom_call.1}
  #allocation0 [shape = 'u32[]', space=smem, size = 0x4, offset = 0x4, fixed_abs, tag = 'smem constant byte address 0x4 - core index']
  #allocation1 [shape = 'u32[144,128]{1,0:T(1,128)}', space=vmem, size = 0x12000, scoped, tag = 'internal scratch']
  %s0 = inlined_call_operand.vmem [shape: f32[72,32], index: 0, kind: input, shape index: {}]
  %s1 = inlined_call_operand.vmem [shape: f32[72,96], index: 1, kind: input, shape index: {}]
  %s2 = inlined_call_operand.vmem [shape: f32[32,48], index: 2, kind: input, shape index: {}]
  %s3 = inlined_call_operand.vmem [shape: f32[32,32], index: 3, kind: input, shape index: {}]
  %s4 = inlined_call_operand.vmem [shape: f32[32,32], index: 4, kind: input, shape index: {}]
  %s5 = inlined_call_operand.vmem [shape: f32[1,32], index: 5, kind: input, shape index: {}]
  %s6 = inlined_call_operand.vmem [shape: f32[32,16], index: 6, kind: input, shape index: {}]
  %s7 = inlined_call_operand.vmem [shape: f32[32,16], index: 7, kind: input, shape index: {}]
  %s8 = inlined_call_operand.vmem [shape: f32[1,16], index: 8, kind: input, shape index: {}]
  %s9 = inlined_call_operand.vmem [shape: f32[1,16], index: 9, kind: input, shape index: {}]
  %s10 = inlined_call_operand.vmem [shape: f32[72,16], index: 10, kind: output, shape index: {0}]
  %s11 = inlined_call_operand.vmem [shape: f32[72,48], index: 11, kind: output, shape index: {1}]
  %12 = xla_tuple %s10, %s11
  %s13 = sld [smem:[#allocation0]]
  $region177: #{tpu_custom_call.1} parent=0
    _
  %s15 = ssub.s32 1, %s13
  %s16 = scalar_select 0, %s15, %s13
  $region1: #{tpu_custom_call.1} parent=0
    #allocation2 [shape = 'u8[16384]{0}', space=vmem, size = 0x4000, scoped, tag = 'output window, operand 0']
    #allocation3 [shape = 'u8[16384]{0}', space=vmem, size = 0x4000, scoped, tag = 'output window, operand 1']
    loop: start=0, step=1, limit=7
    $region2: #{tpu_custom_call.1} parent=1 // loop_pre_header
      _
    $region3: #{tpu_custom_call.1} parent=1 // loop_header
      %s18 = sphi 0, %s22
      %p19 = scmp.ge.s32.totalorder %s18, 7
      %s28 = sphi 0, %s30
      %s31 = sphi 0, %s28
      %s32 = sphi 0, %s31
      %s48 = sphi 0, %s32
      %s54 = sphi 0, %s56
      %s57 = sphi 0, %s54
      %s58 = sphi 0, %s57
      %s74 = sphi 0, %s58
      %s78 = sphi 0, %s78
      %s80 = sphi 0, %s78
      %s81 = sphi 0, %s80
      %s95 = sphi 0, %s81
      %s99 = sphi 0, %s99
      %s101 = sphi 0, %s99
      %s102 = sphi 0, %s101
      %s116 = sphi 0, %s102
      %s120 = sphi 0, %s120
      %s122 = sphi 0, %s120
      %s123 = sphi 0, %s122
      %s137 = sphi 0, %s123
      %s141 = sphi 0, %s141
      %s143 = sphi 0, %s141
      %s144 = sphi 0, %s143
      %s158 = sphi 0, %s144
      %s162 = sphi 0, %s162
      %s164 = sphi 0, %s162
      %s165 = sphi 0, %s164
      %s179 = sphi 0, %s165
      %s183 = sphi 0, %s183
      %s185 = sphi 0, %s183
      %s186 = sphi 0, %s185
      %s200 = sphi 0, %s186
      %s204 = sphi 0, %s204
      %s206 = sphi 0, %s204
      %s207 = sphi 0, %s206
      %s221 = sphi 0, %s207
      %s225 = sphi 0, %s225
      %s227 = sphi 0, %s225
      %s228 = sphi 0, %s227
      %s242 = sphi 0, %s228
      %s248 = sphi 0, %s250
      %s251 = sphi 0, %s248
      %s252 = sphi 0, %s251
      %s268 = sphi 0, %s252
      %s274 = sphi 0, %s276
      %s277 = sphi 0, %s274
      %s278 = sphi 0, %s277
      %s294 = sphi 0, %s278
    $region4: #{tpu_custom_call.1} parent=1 // loop_header_branch
      %21 = sbr.rel (%p19) target = $region8
    $region5: #{tpu_custom_call.1} parent=1 // loop_body
      %s23 = ssub.s32 %s18, 1
      %s24 = ssub.s32 %s18, 2
      %s25 = sadd.s32 %s18, 1
      %s26 = ssub.s32 %s18, %s25
      %p27 = scmp.eq.s32.totalorder %s26, 0
      %s29 = sadd.s32 %s28, 1
      %s30 = scalar_select %p27, %s28, %s29
      %p33 = pneg %p27
      %p34 = scmp.eq.s32.totalorder %s18, 4
      %p35 = por %p33, %p34
      %p36 = scmp.ne.s32.totalorder %s28, %s31
      %p37 = scmp.eq.s32.totalorder %s18, 0
      %p38 = por %p36, %p37
      %p39 = scmp.ne.s32.totalorder %s28, %s31
      %p40 = scmp.eq.s32.totalorder %s23, 4
      %p41 = por %p39, %p40
      %p42 = scmp.ne.s32.totalorder %s31, %s32
      %p43 = scmp.eq.s32.totalorder %s23, 0
      %p44 = por %p42, %p43
      %p45 = scmp.ne.s32.totalorder %s31, %s32
      %p46 = scmp.eq.s32.totalorder %s24, 4
      %p47 = por %p45, %p46
      %p49 = scmp.ne.s32.totalorder %s32, %s48
      %p50 = scmp.eq.s32.totalorder %s24, 0
      %p51 = por %p49, %p50
      %s52 = ssub.s32 %s18, %s25
      %p53 = scmp.eq.s32.totalorder %s52, 0
      %s55 = sadd.s32 %s54, 1
      %s56 = scalar_select %p53, %s54, %s55
      %p59 = pneg %p53
      %p60 = scmp.eq.s32.totalorder %s18, 4
      %p61 = por %p59, %p60
      %p62 = scmp.ne.s32.totalorder %s54, %s57
      %p63 = scmp.eq.s32.totalorder %s18, 0
      %p64 = por %p62, %p63
      %p65 = scmp.ne.s32.totalorder %s54, %s57
      %p66 = scmp.eq.s32.totalorder %s23, 4
      %p67 = por %p65, %p66
      %p68 = scmp.ne.s32.totalorder %s57, %s58
      %p69 = scmp.eq.s32.totalorder %s23, 0
      %p70 = por %p68, %p69
      %p71 = scmp.ne.s32.totalorder %s57, %s58
      %p72 = scmp.eq.s32.totalorder %s24, 4
      %p73 = por %p71, %p72
      %p75 = scmp.ne.s32.totalorder %s58, %s74
      %p76 = scmp.eq.s32.totalorder %s24, 0
      %p77 = por %p75, %p76
      %s79 = sadd.s32 %s78, 1
      %p82 = scmp.eq.s32.totalorder %s18, 4
      %p83 = scmp.ne.s32.totalorder %s78, %s80
      %p84 = scmp.eq.s32.totalorder %s18, 0
      %p85 = por %p83, %p84
      %p86 = scmp.ne.s32.totalorder %s78, %s80
      %p87 = scmp.eq.s32.totalorder %s23, 4
      %p88 = por %p86, %p87
      %p89 = scmp.ne.s32.totalorder %s80, %s81
      %p90 = scmp.eq.s32.totalorder %s23, 0
      %p91 = por %p89, %p90
      %p92 = scmp.ne.s32.totalorder %s80, %s81
      %p93 = scmp.eq.s32.totalorder %s24, 4
      %p94 = por %p92, %p93
      %p96 = scmp.ne.s32.totalorder %s81, %s95
      %p97 = scmp.eq.s32.totalorder %s24, 0
      %p98 = por %p96, %p97
      %s100 = sadd.s32 %s99, 1
      %p103 = scmp.eq.s32.totalorder %s18, 4
      %p104 = scmp.ne.s32.totalorder %s99, %s101
      %p105 = scmp.eq.s32.totalorder %s18, 0
      %p106 = por %p104, %p105
      %p107 = scmp.ne.s32.totalorder %s99, %s101
      %p108 = scmp.eq.s32.totalorder %s23, 4
      %p109 = por %p107, %p108
      %p110 = scmp.ne.s32.totalorder %s101, %s102
      %p111 = scmp.eq.s32.totalorder %s23, 0
      %p112 = por %p110, %p111
      %p113 = scmp.ne.s32.totalorder %s101, %s102
      %p114 = scmp.eq.s32.totalorder %s24, 4
      %p115 = por %p113, %p114
      %p117 = scmp.ne.s32.totalorder %s102, %s116
      %p118 = scmp.eq.s32.totalorder %s24, 0
      %p119 = por %p117, %p118
      %s121 = sadd.s32 %s120, 1
      %p124 = scmp.eq.s32.totalorder %s18, 4
      %p125 = scmp.ne.s32.totalorder %s120, %s122
      %p126 = scmp.eq.s32.totalorder %s18, 0
      %p127 = por %p125, %p126
      %p128 = scmp.ne.s32.totalorder %s120, %s122
      %p129 = scmp.eq.s32.totalorder %s23, 4
      %p130 = por %p128, %p129
      %p131 = scmp.ne.s32.totalorder %s122, %s123
      %p132 = scmp.eq.s32.totalorder %s23, 0
      %p133 = por %p131, %p132
      %p134 = scmp.ne.s32.totalorder %s122, %s123
      %p135 = scmp.eq.s32.totalorder %s24, 4
      %p136 = por %p134, %p135
      %p138 = scmp.ne.s32.totalorder %s123, %s137
      %p139 = scmp.eq.s32.totalorder %s24, 0
      %p140 = por %p138, %p139
      %s142 = sadd.s32 %s141, 1
      %p145 = scmp.eq.s32.totalorder %s18, 4
      %p146 = scmp.ne.s32.totalorder %s141, %s143
      %p147 = scmp.eq.s32.totalorder %s18, 0
      %p148 = por %p146, %p147
      %p149 = scmp.ne.s32.totalorder %s141, %s143
      %p150 = scmp.eq.s32.totalorder %s23, 4
      %p151 = por %p149, %p150
      %p152 = scmp.ne.s32.totalorder %s143, %s144
      %p153 = scmp.eq.s32.totalorder %s23, 0
      %p154 = por %p152, %p153
      %p155 = scmp.ne.s32.totalorder %s143, %s144
      %p156 = scmp.eq.s32.totalorder %s24, 4
      %p157 = por %p155, %p156
      %p159 = scmp.ne.s32.totalorder %s144, %s158
      %p160 = scmp.eq.s32.totalorder %s24, 0
      %p161 = por %p159, %p160
      %s163 = sadd.s32 %s162, 1
      %p166 = scmp.eq.s32.totalorder %s18, 4
      %p167 = scmp.ne.s32.totalorder %s162, %s164
      %p168 = scmp.eq.s32.totalorder %s18, 0
      %p169 = por %p167, %p168
      %p170 = scmp.ne.s32.totalorder %s162, %s164
      %p171 = scmp.eq.s32.totalorder %s23, 4
      %p172 = por %p170, %p171
      %p173 = scmp.ne.s32.totalorder %s164, %s165
      %p174 = scmp.eq.s32.totalorder %s23, 0
      %p175 = por %p173, %p174
      %p176 = scmp.ne.s32.totalorder %s164, %s165
      %p177 = scmp.eq.s32.totalorder %s24, 4
      %p178 = por %p176, %p177
      %p180 = scmp.ne.s32.totalorder %s165, %s179
      %p181 = scmp.eq.s32.totalorder %s24, 0
      %p182 = por %p180, %p181
      %s184 = sadd.s32 %s183, 1
      %p187 = scmp.eq.s32.totalorder %s18, 4
      %p188 = scmp.ne.s32.totalorder %s183, %s185
      %p189 = scmp.eq.s32.totalorder %s18, 0
      %p190 = por %p188, %p189
      %p191 = scmp.ne.s32.totalorder %s183, %s185
      %p192 = scmp.eq.s32.totalorder %s23, 4
      %p193 = por %p191, %p192
      %p194 = scmp.ne.s32.totalorder %s185, %s186
      %p195 = scmp.eq.s32.totalorder %s23, 0
      %p196 = por %p194, %p195
      %p197 = scmp.ne.s32.totalorder %s185, %s186
      %p198 = scmp.eq.s32.totalorder %s24, 4
      %p199 = por %p197, %p198
      %p201 = scmp.ne.s32.totalorder %s186, %s200
      %p202 = scmp.eq.s32.totalorder %s24, 0
      %p203 = por %p201, %p202
      %s205 = sadd.s32 %s204, 1
      %p208 = scmp.eq.s32.totalorder %s18, 4
      %p209 = scmp.ne.s32.totalorder %s204, %s206
      %p210 = scmp.eq.s32.totalorder %s18, 0
      %p211 = por %p209, %p210
      %p212 = scmp.ne.s32.totalorder %s204, %s206
      %p213 = scmp.eq.s32.totalorder %s23, 4
      %p214 = por %p212, %p213
      %p215 = scmp.ne.s32.totalorder %s206, %s207
      %p216 = scmp.eq.s32.totalorder %s23, 0
      %p217 = por %p215, %p216
      %p218 = scmp.ne.s32.totalorder %s206, %s207
      %p219 = scmp.eq.s32.totalorder %s24, 4
      %p220 = por %p218, %p219
      %p222 = scmp.ne.s32.totalorder %s207, %s221
      %p223 = scmp.eq.s32.totalorder %s24, 0
      %p224 = por %p222, %p223
      %s226 = sadd.s32 %s225, 1
      %p229 = scmp.eq.s32.totalorder %s18, 4
      %p230 = scmp.ne.s32.totalorder %s225, %s227
      %p231 = scmp.eq.s32.totalorder %s18, 0
      %p232 = por %p230, %p231
      %p233 = scmp.ne.s32.totalorder %s225, %s227
      %p234 = scmp.eq.s32.totalorder %s23, 4
      %p235 = por %p233, %p234
      %p236 = scmp.ne.s32.totalorder %s227, %s228
      %p237 = scmp.eq.s32.totalorder %s23, 0
      %p238 = por %p236, %p237
      %p239 = scmp.ne.s32.totalorder %s227, %s228
      %p240 = scmp.eq.s32.totalorder %s24, 4
      %p241 = por %p239, %p240
      %p243 = scmp.ne.s32.totalorder %s228, %s242
      %p244 = scmp.eq.s32.totalorder %s24, 0
      %p245 = por %p243, %p244
      %s246 = ssub.s32 %s18, %s25
      %p247 = scmp.eq.s32.totalorder %s246, 0
      %s249 = sadd.s32 %s248, 1
      %s250 = scalar_select %p247, %s248, %s249
      %p253 = pneg %p247
      %p254 = scmp.eq.s32.totalorder %s18, 4
      %p255 = por %p253, %p254
      %p256 = scmp.ne.s32.totalorder %s248, %s251
      %p257 = scmp.eq.s32.totalorder %s18, 0
      %p258 = por %p256, %p257
      %p259 = scmp.ne.s32.totalorder %s248, %s251
      %p260 = scmp.eq.s32.totalorder %s23, 4
      %p261 = por %p259, %p260
      %p262 = scmp.ne.s32.totalorder %s251, %s252
      %p263 = scmp.eq.s32.totalorder %s23, 0
      %p264 = por %p262, %p263
      %p265 = scmp.ne.s32.totalorder %s251, %s252
      %p266 = scmp.eq.s32.totalorder %s24, 4
      %p267 = por %p265, %p266
      %p269 = scmp.ne.s32.totalorder %s252, %s268
      %p270 = scmp.eq.s32.totalorder %s24, 0
      %p271 = por %p269, %p270
      %s272 = ssub.s32 %s18, %s25
      %p273 = scmp.eq.s32.totalorder %s272, 0
      %s275 = sadd.s32 %s274, 1
      %s276 = scalar_select %p273, %s274, %s275
      %p279 = pneg %p273
      %p280 = scmp.eq.s32.totalorder %s18, 4
      %p281 = por %p279, %p280
      %p282 = scmp.ne.s32.totalorder %s274, %s277
      %p283 = scmp.eq.s32.totalorder %s18, 0
      %p284 = por %p282, %p283
      %p285 = scmp.ne.s32.totalorder %s274, %s277
      %p286 = scmp.eq.s32.totalorder %s23, 4
      %p287 = por %p285, %p286
      %p288 = scmp.ne.s32.totalorder %s277, %s278
      %p289 = scmp.eq.s32.totalorder %s23, 0
      %p290 = por %p288, %p289
      %p291 = scmp.ne.s32.totalorder %s277, %s278
      %p292 = scmp.eq.s32.totalorder %s24, 4
      %p293 = por %p291, %p292
      %p295 = scmp.ne.s32.totalorder %s278, %s294
      %p296 = scmp.eq.s32.totalorder %s24, 0
      %p297 = por %p295, %p296
      %p298 = scmp.le.s32.totalorder 1, %s18
      %p299 = scmp.lt.s32.totalorder %s18, 6
      %p300 = pnand %p298, %p299
      %p301 = pneg %p300
      // Predicated region
      $region9: #{tpu_custom_call.1} parent=5 // pred_check
        _
      $region10: #{tpu_custom_call.1} parent=5 // pred_check_branch
        %303 = sbr.rel (%p300) target = $region12
      $region11: #{tpu_custom_call.1} parent=5 // pred_region
        %s304 = ssub.s32 %s18, 1
        // Predicated region
        $region13: #{tpu_custom_call.1} parent=11 // pred_check
          %p305 = pneg %p91
        $region14: #{tpu_custom_call.1} parent=11 // pred_check_branch
          %307 = sbr.rel (%p305) target = $region16
        $region15: #{tpu_custom_call.1} parent=11 // pred_region
          _
        $region16: #{tpu_custom_call.1} parent=11 // pred_fallthru
          _
        // Predicated region
        $region17: #{tpu_custom_call.1} parent=11 // pred_check
          %p308 = pneg %p112
        $region18: #{tpu_custom_call.1} parent=11 // pred_check_branch
          %310 = sbr.rel (%p308) target = $region20
        $region19: #{tpu_custom_call.1} parent=11 // pred_region
          _
        $region20: #{tpu_custom_call.1} parent=11 // pred_fallthru
          _
        // Predicated region
        $region21: #{tpu_custom_call.1} parent=11 // pred_check
          %p311 = pneg %p133
        $region22: #{tpu_custom_call.1} parent=11 // pred_check_branch
          %313 = sbr.rel (%p311) target = $region24
        $region23: #{tpu_custom_call.1} parent=11 // pred_region
          _
        $region24: #{tpu_custom_call.1} parent=11 // pred_fallthru
          _
        // Predicated region
        $region25: #{tpu_custom_call.1} parent=11 // pred_check
          %p314 = pneg %p154
        $region26: #{tpu_custom_call.1} parent=11 // pred_check_branch
          %316 = sbr.rel (%p314) target = $region28
        $region27: #{tpu_custom_call.1} parent=11 // pred_region
          _
        $region28: #{tpu_custom_call.1} parent=11 // pred_fallthru
          _
        // Predicated region
        $region29: #{tpu_custom_call.1} parent=11 // pred_check
          %p317 = pneg %p175
        $region30: #{tpu_custom_call.1} parent=11 // pred_check_branch
          %319 = sbr.rel (%p317) target = $region32
        $region31: #{tpu_custom_call.1} parent=11 // pred_region
          _
        $region32: #{tpu_custom_call.1} parent=11 // pred_fallthru
          _
        // Predicated region
        $region33: #{tpu_custom_call.1} parent=11 // pred_check
          %p320 = pneg %p196
        $region34: #{tpu_custom_call.1} parent=11 // pred_check_branch
          %322 = sbr.rel (%p320) target = $region36
        $region35: #{tpu_custom_call.1} parent=11 // pred_region
          _
        $region36: #{tpu_custom_call.1} parent=11 // pred_fallthru
          _
        // Predicated region
        $region37: #{tpu_custom_call.1} parent=11 // pred_check
          %p323 = pneg %p217
        $region38: #{tpu_custom_call.1} parent=11 // pred_check_branch
          %325 = sbr.rel (%p323) target = $region40
        $region39: #{tpu_custom_call.1} parent=11 // pred_region
          _
        $region40: #{tpu_custom_call.1} parent=11 // pred_fallthru
          _
        // Predicated region
        $region41: #{tpu_custom_call.1} parent=11 // pred_check
          %p326 = pneg %p238
        $region42: #{tpu_custom_call.1} parent=11 // pred_check_branch
          %328 = sbr.rel (%p326) target = $region44
        $region43: #{tpu_custom_call.1} parent=11 // pred_region
          _
        $region44: #{tpu_custom_call.1} parent=11 // pred_fallthru
          _
      $region12: #{tpu_custom_call.1} parent=5 // pred_fallthru
        _
      %p329 = scmp.lt.s32.totalorder %s18, 5
      // Predicated region
      $region45: #{tpu_custom_call.1} parent=5 // pred_check
        %p330 = pneg %p329
      $region46: #{tpu_custom_call.1} parent=5 // pred_check_branch
        %332 = sbr.rel (%p330) target = $region48
      $region47: #{tpu_custom_call.1} parent=5 // pred_region
        // Predicated region
        $region49: #{tpu_custom_call.1} parent=47 // pred_check
          %p333 = pneg %p38
        $region50: #{tpu_custom_call.1} parent=47 // pred_check_branch
          %335 = sbr.rel (%p333) target = $region52
        $region51: #{tpu_custom_call.1} parent=47 // pred_region
          %s336 = smul.u32 2, %s18
          %s337 = ssub.s32 9, %s336
          %p338 = scmp.lt.s32.totalorder %s337, 2
          %s339 = scalar_select %p338, %s337, 2
          %s340 = smul.u32 128, %s339
          %p341 = scmp.lt.s32.totalorder %s336, 8
          %s342 = scalar_select %p341, %s336, 8
          %s343 = smul.addr %s342, 8
          %s344 = scalar_lea.vmem %s0, %s343
          %s345 = smul.u32 2, %s18
          %s346 = ssub.s32 9, %s345
          %p347 = scmp.lt.s32.totalorder %s346, 2
          %s348 = scalar_select %p347, %s346, 2
          %s349 = smul.u32 128, %s348
        $region52: #{tpu_custom_call.1} parent=47 // pred_fallthru
          _
        // Predicated region
        $region53: #{tpu_custom_call.1} parent=47 // pred_check
          %p350 = pneg %p64
        $region54: #{tpu_custom_call.1} parent=47 // pred_check_branch
          %352 = sbr.rel (%p350) target = $region56
        $region55: #{tpu_custom_call.1} parent=47 // pred_region
          %s353 = smul.u32 2, %s18
          %s354 = ssub.s32 9, %s353
          %p355 = scmp.lt.s32.totalorder %s354, 2
          %s356 = scalar_select %p355, %s354, 2
          %s357 = smul.u32 128, %s356
          %p358 = scmp.lt.s32.totalorder %s353, 8
          %s359 = scalar_select %p358, %s353, 8
          %s360 = smul.addr %s359, 8
          %s361 = scalar_lea.vmem %s1, %s360
          %s362 = smul.u32 2, %s18
          %s363 = ssub.s32 9, %s362
          %p364 = scmp.lt.s32.totalorder %s363, 2
          %s365 = scalar_select %p364, %s363, 2
          %s366 = smul.u32 128, %s365
        $region56: #{tpu_custom_call.1} parent=47 // pred_fallthru
          _
      $region48: #{tpu_custom_call.1} parent=5 // pred_fallthru
        _
      %p367 = scmp.le.s32.totalorder 1, %s18
      %p368 = scmp.lt.s32.totalorder %s18, 6
      %p369 = pnand %p367, %p368
      %p370 = pneg %p369
      // Predicated region
      $region57: #{tpu_custom_call.1} parent=5 // pred_check
        _
      $region58: #{tpu_custom_call.1} parent=5 // pred_check_branch
        %372 = sbr.rel (%p369) target = $region60
      $region59: #{tpu_custom_call.1} parent=5 // pred_region
        %s373 = ssub.s32 %s18, 1
        %s374 = smul.u32 2, %s23
        %s375 = ssub.s32 9, %s374
        %p376 = scmp.lt.s32.totalorder %s375, 2
        %s377 = scalar_select %p376, %s375, 2
        %s378 = smul.u32 128, %s377
        %p379 = scmp.lt.s32.totalorder %s374, 8
        %s380 = scalar_select %p379, %s374, 8
        %s381 = smul.addr %s380, 8
        %s382 = scalar_lea.vmem %s0, %s381
        %p383 = pneg %p44
        %p384 = pneg %p41
        %s385 = smul.u32 2, %s23
        %s386 = ssub.s32 9, %s385
        %p387 = scmp.lt.s32.totalorder %s386, 2
        %s388 = scalar_select %p387, %s386, 2
        %s389 = smul.u32 128, %s388
        %p390 = scmp.lt.s32.totalorder %s385, 8
        %s391 = scalar_select %p390, %s385, 8
        %s392 = smul.addr %s391, 8
        %s393 = scalar_lea.vmem %s1, %s392
        %p394 = pneg %p70
        %p395 = pneg %p67
        %p396 = pneg %p91
        %p397 = pneg %p88
        %p398 = pneg %p112
        %p399 = pneg %p109
        %p400 = pneg %p133
        %p401 = pneg %p130
        %p402 = pneg %p154
        %p403 = pneg %p151
        %p404 = pneg %p175
        %p405 = pneg %p172
        %p406 = pneg %p196
        %p407 = pneg %p193
        %p408 = pneg %p217
        %p409 = pneg %p214
        %p410 = pneg %p238
        %p411 = pneg %p235
        %p412 = pneg %p264
        %p413 = pneg %p261
        %s414 = sand.u32 %s251, 1
        %s415 = sand.u32 %s251, 1
        %s416 = smul.addr %s415, 16
        %s417 = scalar_lea.vmem [#allocation2], %s416
        %p418 = pneg %p290
        %p419 = pneg %p287
        %s420 = sand.u32 %s277, 1
        %s421 = sand.u32 %s277, 1
        %s422 = smul.addr %s421, 16
        %s423 = scalar_lea.vmem [#allocation3], %s422
        %s424 = smul.u32 2, %s23
        %s425 = ssub.s32 9, %s424
        %p426 = scmp.lt.s32.totalorder %s425, 2
        %s427 = scalar_select %p426, %s425, 2
        %s428 = smul.u32 128, %s427
        %p429 = scmp.lt.s32.totalorder %s424, 8
        %s430 = scalar_select %p429, %s424, 8
        %s431 = smul.addr %s430, 8
        %s432 = scalar_lea.vmem %s0, %s431
        %s433 = smul.u32 2, %s23
        %s434 = ssub.s32 9, %s433
        %p435 = scmp.lt.s32.totalorder %s434, 2
        %s436 = scalar_select %p435, %s434, 2
        %s437 = smul.u32 128, %s436
        %s438 = smul.u32 2, %s23
        %s439 = ssub.s32 9, %s438
        %p440 = scmp.lt.s32.totalorder %s439, 2
        %s441 = scalar_select %p440, %s439, 2
        %s442 = smul.u32 128, %s441
        %p443 = scmp.lt.s32.totalorder %s438, 8
        %s444 = scalar_select %p443, %s438, 8
        %s445 = smul.addr %s444, 8
        %s446 = scalar_lea.vmem %s1, %s445
        %s447 = smul.u32 2, %s23
        %s448 = ssub.s32 9, %s447
        %p449 = scmp.lt.s32.totalorder %s448, 2
        %s450 = scalar_select %p449, %s448, 2
        %s451 = smul.u32 128, %s450
        %s452 = smul.u32 2, %s23
        %s453 = ssub.s32 9, %s452
        %p454 = scmp.lt.s32.totalorder %s453, 2
        %s455 = scalar_select %p454, %s453, 2
        %s456 = smul.u32 128, %s455
        %s457 = smul.u32 2, %s23
        %s458 = ssub.s32 9, %s457
        %p459 = scmp.lt.s32.totalorder %s458, 2
        %s460 = scalar_select %p459, %s458, 2
        %s461 = smul.u32 128, %s460
        %v462 = vld [vmem:[%s446] sm:$0xff]
        %v463 = vld [vmem:[%s446 + $0x8] sm:$0xff]
        %v464 = vld [vmem:[%s2] sm:$0xff]
        %v465 = vld [vmem:[%s2 + $0x8] sm:$0xff]
        %v466 = vld [vmem:[%s2 + $0x10] sm:$0xff]
        %v467 = vld [vmem:[%s2 + $0x18] sm:$0xff]
        %vm468 = vcmask 261120
        %v470 = vsel %vm468, %v462, 0
        %v473 = vsel %vm468, %v463, 0
        %475 = vmatprep.subr.mxu0 0.0
        %476 = vmatpush1.msra.mxu0 %v464
        %477 = vmatprep.subr.mxu0 0.0
        %478 = vmatpush1.msra.mxu0 %v465
        %479 = vmatprep.subr.mxu0 0.0
        %480 = vmatpush1.msra.mxu0 %v466
        %481 = vmatprep.subr.mxu0 0.0
        %482 = vmatpush1.msra.mxu0 %v467
        %483 = vmatprep.subr.mxu0 0.0
        %484 = vmatpush1.msra.mxu0 0.0
        %485 = vmatprep.subr.mxu0 0.0
        %486 = vmatpush1.msra.mxu0 0.0
        %487 = vmatprep.subr.mxu0 0.0
        %488 = vmatpush1.msra.mxu0 0.0
        %489 = vmatprep.subr.mxu0 0.0
        %490 = vmatpush1.msra.mxu0 0.0
        %491 = vmatprep.subr.mxu0 0.0
        %492 = vmatpush1.msra.mxu0 0.0
        %493 = vmatprep.subr.mxu0 0.0
        %494 = vmatpush1.msra.mxu0 0.0
        %495 = vmatprep.subr.mxu0 0.0
        %496 = vmatpush1.msra.mxu0 0.0
        %497 = vmatprep.subr.mxu0 0.0
        %498 = vmatpush1.msra.mxu0 0.0
        %499 = vmatprep.subr.mxu0 0.0
        %500 = vmatpush1.msra.mxu0 0.0
        %501 = vmatprep.subr.mxu0 0.0
        %502 = vmatpush1.msra.mxu0 0.0
        %503 = vmatprep.subr.mxu0 0.0
        %504 = vmatpush1.msra.mxu0 0.0
        %505 = vmatprep.subr.mxu0 0.0
        %506 = vmatpush1.msra.mxu0 0.0
        %507 = vmatprep.subr.mxu0 0.0
        %508 = vmatpush1.msra.mxu0 0.0
        %509 = vmatprep.subr.mxu0 0.0
        %510 = vmatpush1.msra.mxu0 0.0
        %511 = vmatprep.subr.mxu0 0.0
        %512 = vmatpush1.msra.mxu0 0.0
        %513 = vmatprep.subr.mxu0 0.0
        %514 = vmatpush1.msra.mxu0 0.0
        %515 = vmatprep.subr.mxu0 0.0
        %516 = vmatpush1.msra.mxu0 0.0
        %517 = vmatprep.subr.mxu0 0.0
        %518 = vmatpush1.msra.mxu0 0.0
        %519 = vmatprep.subr.mxu0 0.0
        %520 = vmatpush1.msra.mxu0 0.0
        %521 = vmatprep.subr.mxu0 0.0
        %522 = vmatpush1.msra.mxu0 0.0
        %523 = vmatprep.subr.mxu0 0.0
        %524 = vmatpush1.msra.mxu0 0.0
        %525 = vmatprep.subr.mxu0 0.0
        %526 = vmatpush1.msra.mxu0 0.0
        %527 = vmatprep.subr.mxu0 0.0
        %528 = vmatpush1.msra.mxu0 0.0
        %529 = vmatprep.subr.mxu0 0.0
        %530 = vmatpush1.msra.mxu0 0.0
        %531 = vmatprep.subr.mxu0 0.0
        %532 = vmatpush1.msra.mxu0 0.0
        %533 = vmatprep.subr.mxu0 0.0
        %534 = vmatpush1.msra.mxu0 0.0
        %535 = vmatprep.subr.mxu0 0.0
        %536 = vmatpush1.msra.mxu0 0.0
        %537 = vmatprep.subr.mxu0 0.0
        %538 = vmatpush1.msra.mxu0 0.0
        %539 = vmatprep.mubr.f32.mxu0 0.0
        %540 = vmatmul.mubr.f32.gmra.mrb[0].mxu0 %v470
        %v541 = vpop.f32.mrb[0].mxu0
        %v542 = vadd.f32 0.0, %v541
        %v543 = vpop.f32.mrb[0].mxu0
        %544 = vmatprep.mubr.f32.mxu0 0.0
        %545 = vmatmul.mubr.f32.gmra.mrb[0].mxu0 %v473
        %v546 = vpop.f32.mrb[0].mxu0
        %v547 = vadd.f32 0.0, %v546
        %v548 = vpop.f32.mrb[0].mxu0
        %549 = vdwg.mxu0
        %v550 = vmul.f32 %v542, %v542
        %v551 = vmul.f32 %v547, %v547
        %552 = vrot.lane.b32.xlu0 %v462, 96
        %v553 = vpop.permute.xlu0 %552
        %554 = vrot.lane.b32.xlu0 %v463, 96
        %v555 = vpop.permute.xlu0 %554
        %v556 = vsel %vm468, %v553, 0
        %v558 = vsel %vm468, %v555, 0
        %560 = vmatprep.subr.mxu0 0.0
        %561 = vmatpush1.msra.mxu0 %v464
        %562 = vmatprep.subr.mxu0 0.0
        %563 = vmatpush1.msra.mxu0 %v465
        %564 = vmatprep.subr.mxu0 0.0
        %565 = vmatpush1.msra.mxu0 %v466
        %566 = vmatprep.subr.mxu0 0.0
        %567 = vmatpush1.msra.mxu0 %v467
        %568 = vmatprep.subr.mxu0 0.0
        %569 = vmatpush1.msra.mxu0 0.0
        %570 = vmatprep.subr.mxu0 0.0
        %571 = vmatpush1.msra.mxu0 0.0
        %572 = vmatprep.subr.mxu0 0.0
        %573 = vmatpush1.msra.mxu0 0.0
        %574 = vmatprep.subr.mxu0 0.0
        %575 = vmatpush1.msra.mxu0 0.0
        %576 = vmatprep.subr.mxu0 0.0
        %577 = vmatpush1.msra.mxu0 0.0
        %578 = vmatprep.subr.mxu0 0.0
        %579 = vmatpush1.msra.mxu0 0.0
        %580 = vmatprep.subr.mxu0 0.0
        %581 = vmatpush1.msra.mxu0 0.0
        %582 = vmatprep.subr.mxu0 0.0
        %583 = vmatpush1.msra.mxu0 0.0
        %584 = vmatprep.subr.mxu0 0.0
        %585 = vmatpush1.msra.mxu0 0.0
        %586 = vmatprep.subr.mxu0 0.0
        %587 = vmatpush1.msra.mxu0 0.0
        %588 = vmatprep.subr.mxu0 0.0
        %589 = vmatpush1.msra.mxu0 0.0
        %590 = vmatprep.subr.mxu0 0.0
        %591 = vmatpush1.msra.mxu0 0.0
        %592 = vmatprep.subr.mxu0 0.0
        %593 = vmatpush1.msra.mxu0 0.0
        %594 = vmatprep.subr.mxu0 0.0
        %595 = vmatpush1.msra.mxu0 0.0
        %596 = vmatprep.subr.mxu0 0.0
        %597 = vmatpush1.msra.mxu0 0.0
        %598 = vmatprep.subr.mxu0 0.0
        %599 = vmatpush1.msra.mxu0 0.0
        %600 = vmatprep.subr.mxu0 0.0
        %601 = vmatpush1.msra.mxu0 0.0
        %602 = vmatprep.subr.mxu0 0.0
        %603 = vmatpush1.msra.mxu0 0.0
        %604 = vmatprep.subr.mxu0 0.0
        %605 = vmatpush1.msra.mxu0 0.0
        %606 = vmatprep.subr.mxu0 0.0
        %607 = vmatpush1.msra.mxu0 0.0
        %608 = vmatprep.subr.mxu0 0.0
        %609 = vmatpush1.msra.mxu0 0.0
        %610 = vmatprep.subr.mxu0 0.0
        %611 = vmatpush1.msra.mxu0 0.0
        %612 = vmatprep.subr.mxu0 0.0
        %613 = vmatpush1.msra.mxu0 0.0
        %614 = vmatprep.subr.mxu0 0.0
        %615 = vmatpush1.msra.mxu0 0.0
        %616 = vmatprep.subr.mxu0 0.0
        %617 = vmatpush1.msra.mxu0 0.0
        %618 = vmatprep.subr.mxu0 0.0
        %619 = vmatpush1.msra.mxu0 0.0
        %620 = vmatprep.subr.mxu0 0.0
        %621 = vmatpush1.msra.mxu0 0.0
        %622 = vmatprep.subr.mxu0 0.0
        %623 = vmatpush1.msra.mxu0 0.0
        %624 = vmatprep.mubr.f32.mxu0 0.0
        %625 = vmatmul.mubr.f32.gmra.mrb[0].mxu0 %v556
        %v626 = vpop.f32.mrb[0].mxu0
        %v627 = vadd.f32 0.0, %v626
        %v628 = vpop.f32.mrb[0].mxu0
        %629 = vmatprep.mubr.f32.mxu0 0.0
        %630 = vmatmul.mubr.f32.gmra.mrb[0].mxu0 %v558
        %v631 = vpop.f32.mrb[0].mxu0
        %v632 = vadd.f32 0.0, %v631
        %v633 = vpop.f32.mrb[0].mxu0
        %634 = vdwg.mxu0
        %v635 = vmul.f32 %v627, %v627
        %v636 = vmul.f32 %v632, %v632
        %v637 = vadd.f32 %v550, %v635
        %v638 = vadd.f32 %v551, %v636
        %639 = vrot.lane.b32.xlu0 %v462, 64
        %v640 = vpop.permute.xlu0 %639
        %641 = vrot.lane.b32.xlu0 %v463, 64
        %v642 = vpop.permute.xlu0 %641
        %v643 = vsel %vm468, %v640, 0
        %v645 = vsel %vm468, %v642, 0
        %647 = vmatprep.subr.mxu0 0.0
        %648 = vmatpush1.msra.mxu0 %v464
        %649 = vmatprep.subr.mxu0 0.0
        %650 = vmatpush1.msra.mxu0 %v465
        %651 = vmatprep.subr.mxu0 0.0
        %652 = vmatpush1.msra.mxu0 %v466
        %653 = vmatprep.subr.mxu0 0.0
        %654 = vmatpush1.msra.mxu0 %v467
        %655 = vmatprep.subr.mxu0 0.0
        %656 = vmatpush1.msra.mxu0 0.0
        %657 = vmatprep.subr.mxu0 0.0
        %658 = vmatpush1.msra.mxu0 0.0
        %659 = vmatprep.subr.mxu0 0.0
        %660 = vmatpush1.msra.mxu0 0.0
        %661 = vmatprep.subr.mxu0 0.0
        %662 = vmatpush1.msra.mxu0 0.0
        %663 = vmatprep.subr.mxu0 0.0
        %664 = vmatpush1.msra.mxu0 0.0
        %665 = vmatprep.subr.mxu0 0.0
        %666 = vmatpush1.msra.mxu0 0.0
        %667 = vmatprep.subr.mxu0 0.0
        %668 = vmatpush1.msra.mxu0 0.0
        %669 = vmatprep.subr.mxu0 0.0
        %670 = vmatpush1.msra.mxu0 0.0
        %671 = vmatprep.subr.mxu0 0.0
        %672 = vmatpush1.msra.mxu0 0.0
        %673 = vmatprep.subr.mxu0 0.0
        %674 = vmatpush1.msra.mxu0 0.0
        %675 = vmatprep.subr.mxu0 0.0
        %676 = vmatpush1.msra.mxu0 0.0
        %677 = vmatprep.subr.mxu0 0.0
        %678 = vmatpush1.msra.mxu0 0.0
        %679 = vmatprep.subr.mxu0 0.0
        %680 = vmatpush1.msra.mxu0 0.0
        %681 = vmatprep.subr.mxu0 0.0
        %682 = vmatpush1.msra.mxu0 0.0
        %683 = vmatprep.subr.mxu0 0.0
        %684 = vmatpush1.msra.mxu0 0.0
        %685 = vmatprep.subr.mxu0 0.0
        %686 = vmatpush1.msra.mxu0 0.0
        %687 = vmatprep.subr.mxu0 0.0
        %688 = vmatpush1.msra.mxu0 0.0
        %689 = vmatprep.subr.mxu0 0.0
        %690 = vmatpush1.msra.mxu0 0.0
        %691 = vmatprep.subr.mxu0 0.0
        %692 = vmatpush1.msra.mxu0 0.0
        %693 = vmatprep.subr.mxu0 0.0
        %694 = vmatpush1.msra.mxu0 0.0
        %695 = vmatprep.subr.mxu0 0.0
        %696 = vmatpush1.msra.mxu0 0.0
        %697 = vmatprep.subr.mxu0 0.0
        %698 = vmatpush1.msra.mxu0 0.0
        %699 = vmatprep.subr.mxu0 0.0
        %700 = vmatpush1.msra.mxu0 0.0
        %701 = vmatprep.subr.mxu0 0.0
        %702 = vmatpush1.msra.mxu0 0.0
        %703 = vmatprep.subr.mxu0 0.0
        %704 = vmatpush1.msra.mxu0 0.0
        %705 = vmatprep.subr.mxu0 0.0
        %706 = vmatpush1.msra.mxu0 0.0
        %707 = vmatprep.subr.mxu0 0.0
        %708 = vmatpush1.msra.mxu0 0.0
        %709 = vmatprep.subr.mxu0 0.0
        %710 = vmatpush1.msra.mxu0 0.0
        %711 = vmatprep.mubr.f32.mxu0 0.0
        %712 = vmatmul.mubr.f32.gmra.mrb[0].mxu0 %v643
        %v713 = vpop.f32.mrb[0].mxu0
        %v714 = vadd.f32 0.0, %v713
        %v715 = vpop.f32.mrb[0].mxu0
        %716 = vmatprep.mubr.f32.mxu0 0.0
        %717 = vmatmul.mubr.f32.gmra.mrb[0].mxu0 %v645
        %v718 = vpop.f32.mrb[0].mxu0
        %v719 = vadd.f32 0.0, %v718
        %v720 = vpop.f32.mrb[0].mxu0
        %721 = vdwg.mxu0
        %v722 = vmul.f32 %v714, %v714
        %v723 = vmul.f32 %v719, %v719
        %v724 = vadd.f32 %v637, %v722
        %v725 = vadd.f32 %v638, %v723
        %v726 = vrsqrt.pop %v724
        %v727 = vmul.f32 %v724, %v726
        %vm728 = vcmp.eq.f32.partialorder %v724, inf
        %v729 = vsel %vm728, %v724, %v727
        %vm730 = vcmp.eq.f32.partialorder %v724, 0.0
        %v731 = vand.u32 %v724, 2147483648
        %v732 = vsel %vm730, %v731, %v729
        %v733 = vrsqrt.pop %v725
        %v734 = vmul.f32 %v725, %v733
        %vm735 = vcmp.eq.f32.partialorder %v725, inf
        %v736 = vsel %vm735, %v725, %v734
        %vm737 = vcmp.eq.f32.partialorder %v725, 0.0
        %v738 = vand.u32 %v725, 2147483648
        %v739 = vsel %vm737, %v738, %v736
        %v740 = vld [vmem:[%s432] sm:$0xff]
        %v741 = vld [vmem:[%s432 + $0x8] sm:$0xff]
        %v742 = vld [vmem:[%s3] sm:$0xff]
        %v743 = vld [vmem:[%s3 + $0x8] sm:$0xff]
        %v744 = vld [vmem:[%s3 + $0x10] sm:$0xff]
        %v745 = vld [vmem:[%s3 + $0x18] sm:$0xff]
        %v746 = vld [vmem:[%s4] sm:$0xff]
        %v747 = vld [vmem:[%s4 + $0x8] sm:$0xff]
        %v748 = vld [vmem:[%s4 + $0x10] sm:$0xff]
        %v749 = vld [vmem:[%s4 + $0x18] sm:$0xff]
        %v751 = vsel %vm468, %v732, 0
        %v754 = vsel %vm468, %v739, 0
        %756 = vmatprep.subr.mxu0 0.0
        %757 = vmatpush1.msra.mxu0 %v746
        %758 = vmatprep.subr.mxu0 0.0
        %759 = vmatpush1.msra.mxu0 %v747
        %760 = vmatprep.subr.mxu0 0.0
        %761 = vmatpush1.msra.mxu0 %v748
        %762 = vmatprep.subr.mxu0 0.0
        %763 = vmatpush1.msra.mxu0 %v749
        %764 = vmatprep.subr.mxu0 0.0
        %765 = vmatpush1.msra.mxu0 0.0
        %766 = vmatprep.subr.mxu0 0.0
        %767 = vmatpush1.msra.mxu0 0.0
        %768 = vmatprep.subr.mxu0 0.0
        %769 = vmatpush1.msra.mxu0 0.0
        %770 = vmatprep.subr.mxu0 0.0
        %771 = vmatpush1.msra.mxu0 0.0
        %772 = vmatprep.subr.mxu0 0.0
        %773 = vmatpush1.msra.mxu0 0.0
        %774 = vmatprep.subr.mxu0 0.0
        %775 = vmatpush1.msra.mxu0 0.0
        %776 = vmatprep.subr.mxu0 0.0
        %777 = vmatpush1.msra.mxu0 0.0
        %778 = vmatprep.subr.mxu0 0.0
        %779 = vmatpush1.msra.mxu0 0.0
        %780 = vmatprep.subr.mxu0 0.0
        %781 = vmatpush1.msra.mxu0 0.0
        %782 = vmatprep.subr.mxu0 0.0
        %783 = vmatpush1.msra.mxu0 0.0
        %784 = vmatprep.subr.mxu0 0.0
        %785 = vmatpush1.msra.mxu0 0.0
        %786 = vmatprep.subr.mxu0 0.0
        %787 = vmatpush1.msra.mxu0 0.0
        %788 = vmatprep.subr.mxu0 0.0
        %789 = vmatpush1.msra.mxu0 0.0
        %790 = vmatprep.subr.mxu0 0.0
        %791 = vmatpush1.msra.mxu0 0.0
        %792 = vmatprep.subr.mxu0 0.0
        %793 = vmatpush1.msra.mxu0 0.0
        %794 = vmatprep.subr.mxu0 0.0
        %795 = vmatpush1.msra.mxu0 0.0
        %796 = vmatprep.subr.mxu0 0.0
        %797 = vmatpush1.msra.mxu0 0.0
        %798 = vmatprep.subr.mxu0 0.0
        %799 = vmatpush1.msra.mxu0 0.0
        %800 = vmatprep.subr.mxu0 0.0
        %801 = vmatpush1.msra.mxu0 0.0
        %802 = vmatprep.subr.mxu0 0.0
        %803 = vmatpush1.msra.mxu0 0.0
        %804 = vmatprep.subr.mxu0 0.0
        %805 = vmatpush1.msra.mxu0 0.0
        %806 = vmatprep.subr.mxu0 0.0
        %807 = vmatpush1.msra.mxu0 0.0
        %808 = vmatprep.subr.mxu0 0.0
        %809 = vmatpush1.msra.mxu0 0.0
        %810 = vmatprep.subr.mxu0 0.0
        %811 = vmatpush1.msra.mxu0 0.0
        %812 = vmatprep.subr.mxu0 0.0
        %813 = vmatpush1.msra.mxu0 0.0
        %814 = vmatprep.subr.mxu0 0.0
        %815 = vmatpush1.msra.mxu0 0.0
        %816 = vmatprep.subr.mxu0 0.0
        %817 = vmatpush1.msra.mxu0 0.0
        %818 = vmatprep.subr.mxu0 0.0
        %819 = vmatpush1.msra.mxu0 0.0
        %820 = vmatprep.mubr.f32.mxu0 0.0
        %821 = vmatmul.mubr.f32.gmra.mrb[0].mxu0 %v751
        %v822 = vpop.f32.mrb[0].mxu0
        %v823 = vadd.f32 0.0, %v822
        %v824 = vpop.f32.mrb[0].mxu0
        %825 = vmatprep.mubr.f32.mxu0 0.0
        %826 = vmatmul.mubr.f32.gmra.mrb[0].mxu0 %v754
        %v827 = vpop.f32.mrb[0].mxu0
        %v828 = vadd.f32 0.0, %v827
        %v829 = vpop.f32.mrb[0].mxu0
        %830 = vdwg.mxu0
        %v832 = vsel %vm468, %v740, 0
        %v835 = vsel %vm468, %v741, 0
        %837 = vmatprep.subr.mxu0 0.0
        %838 = vmatpush1.msra.mxu0 %v742
        %839 = vmatprep.subr.mxu0 0.0
        %840 = vmatpush1.msra.mxu0 %v743
        %841 = vmatprep.subr.mxu0 0.0
        %842 = vmatpush1.msra.mxu0 %v744
        %843 = vmatprep.subr.mxu0 0.0
        %844 = vmatpush1.msra.mxu0 %v745
        %845 = vmatprep.subr.mxu0 0.0
        %846 = vmatpush1.msra.mxu0 0.0
        %847 = vmatprep.subr.mxu0 0.0
        %848 = vmatpush1.msra.mxu0 0.0
        %849 = vmatprep.subr.mxu0 0.0
        %850 = vmatpush1.msra.mxu0 0.0
        %851 = vmatprep.subr.mxu0 0.0
        %852 = vmatpush1.msra.mxu0 0.0
        %853 = vmatprep.subr.mxu0 0.0
        %854 = vmatpush1.msra.mxu0 0.0
        %855 = vmatprep.subr.mxu0 0.0
        %856 = vmatpush1.msra.mxu0 0.0
        %857 = vmatprep.subr.mxu0 0.0
        %858 = vmatpush1.msra.mxu0 0.0
        %859 = vmatprep.subr.mxu0 0.0
        %860 = vmatpush1.msra.mxu0 0.0
        %861 = vmatprep.subr.mxu0 0.0
        %862 = vmatpush1.msra.mxu0 0.0
        %863 = vmatprep.subr.mxu0 0.0
        %864 = vmatpush1.msra.mxu0 0.0
        %865 = vmatprep.subr.mxu0 0.0
        %866 = vmatpush1.msra.mxu0 0.0
        %867 = vmatprep.subr.mxu0 0.0
        %868 = vmatpush1.msra.mxu0 0.0
        %869 = vmatprep.subr.mxu0 0.0
        %870 = vmatpush1.msra.mxu0 0.0
        %871 = vmatprep.subr.mxu0 0.0
        %872 = vmatpush1.msra.mxu0 0.0
        %873 = vmatprep.subr.mxu0 0.0
        %874 = vmatpush1.msra.mxu0 0.0
        %875 = vmatprep.subr.mxu0 0.0
        %876 = vmatpush1.msra.mxu0 0.0
        %877 = vmatprep.subr.mxu0 0.0
        %878 = vmatpush1.msra.mxu0 0.0
        %879 = vmatprep.subr.mxu0 0.0
        %880 = vmatpush1.msra.mxu0 0.0
        %881 = vmatprep.subr.mxu0 0.0
        %882 = vmatpush1.msra.mxu0 0.0
        %883 = vmatprep.subr.mxu0 0.0
        %884 = vmatpush1.msra.mxu0 0.0
        %885 = vmatprep.subr.mxu0 0.0
        %886 = vmatpush1.msra.mxu0 0.0
        %887 = vmatprep.subr.mxu0 0.0
        %888 = vmatpush1.msra.mxu0 0.0
        %889 = vmatprep.subr.mxu0 0.0
        %890 = vmatpush1.msra.mxu0 0.0
        %891 = vmatprep.subr.mxu0 0.0
        %892 = vmatpush1.msra.mxu0 0.0
        %893 = vmatprep.subr.mxu0 0.0
        %894 = vmatpush1.msra.mxu0 0.0
        %895 = vmatprep.subr.mxu0 0.0
        %896 = vmatpush1.msra.mxu0 0.0
        %897 = vmatprep.subr.mxu0 0.0
        %898 = vmatpush1.msra.mxu0 0.0
        %899 = vmatprep.subr.mxu0 0.0
        %900 = vmatpush1.msra.mxu0 0.0
        %901 = vmatprep.mubr.f32.mxu0 0.0
        %902 = vmatmul.mubr.f32.gmra.mrb[0].mxu0 %v832
        %v903 = vpop.f32.mrb[0].mxu0
        %v904 = vadd.f32 %v823, %v903
        %v905 = vpop.f32.mrb[0].mxu0
        %906 = vmatprep.mubr.f32.mxu0 0.0
        %907 = vmatmul.mubr.f32.gmra.mrb[0].mxu0 %v835
        %v908 = vpop.f32.mrb[0].mxu0
        %v909 = vadd.f32 %v828, %v908
        %v910 = vpop.f32.mrb[0].mxu0
        %911 = vdwg.mxu0
        %v912 = vld [vmem:[%s5] sm:$0x1]
        %v914 = vlaneseq
        %v915 = vshrl.u32 %v914, 7
        %v916 = vsub.s32 0, %v915
        %v917 = vrot.slane %v912, %v916
        %v919 = vadd.f32 %v904, %v917
        %v920 = vadd.f32 %v909, %v917
        %v921 = vxor.u32 %v919, 2147483648
        %v922 = vxor.u32 %v920, 2147483648
        %v923 = vmul.f32 %v921, 1.442695
        %v924 = vpow.pop %v923
        %v925 = vmul.f32 %v922, 1.442695
        %v926 = vpow.pop %v925
        %v927 = vadd.f32 %v924, 1.0
        %v928 = vadd.f32 %v926, 1.0
        %v929 = vrcp.pop %v927
        %v930 = vmul.f32 1.0, %v929
        %v931 = vrcp.pop %v928
        %v932 = vmul.f32 1.0, %v931
        %v933 = vmul.f32 %v919, %v930
        %v934 = vmul.f32 %v920, %v932
        %v935 = vld [vmem:[%s6] sm:$0xff]
        %v936 = vld [vmem:[%s6 + $0x8] sm:$0xff]
        %v937 = vld [vmem:[%s6 + $0x10] sm:$0xff]
        %v938 = vld [vmem:[%s6 + $0x18] sm:$0xff]
        %v939 = vld [vmem:[%s8] sm:$0x1]
        %v941 = vlaneseq
        %v942 = vshrl.u32 %v941, 7
        %v943 = vsub.s32 0, %v942
        %v944 = vrot.slane %v939, %v943
        %v947 = vsel %vm468, %v933, 0
        %v950 = vsel %vm468, %v934, 0
        %952 = vmatprep.subr.mxu0 0.0
        %953 = vmatpush1.msra.mxu0 %v935
        %954 = vmatprep.subr.mxu0 0.0
        %955 = vmatpush1.msra.mxu0 %v936
        %956 = vmatprep.subr.mxu0 0.0
        %957 = vmatpush1.msra.mxu0 %v937
        %958 = vmatprep.subr.mxu0 0.0
        %959 = vmatpush1.msra.mxu0 %v938
        %960 = vmatprep.subr.mxu0 0.0
        %961 = vmatpush1.msra.mxu0 0.0
        %962 = vmatprep.subr.mxu0 0.0
        %963 = vmatpush1.msra.mxu0 0.0
        %964 = vmatprep.subr.mxu0 0.0
        %965 = vmatpush1.msra.mxu0 0.0
        %966 = vmatprep.subr.mxu0 0.0
        %967 = vmatpush1.msra.mxu0 0.0
        %968 = vmatprep.subr.mxu0 0.0
        %969 = vmatpush1.msra.mxu0 0.0
        %970 = vmatprep.subr.mxu0 0.0
        %971 = vmatpush1.msra.mxu0 0.0
        %972 = vmatprep.subr.mxu0 0.0
        %973 = vmatpush1.msra.mxu0 0.0
        %974 = vmatprep.subr.mxu0 0.0
        %975 = vmatpush1.msra.mxu0 0.0
        %976 = vmatprep.subr.mxu0 0.0
        %977 = vmatpush1.msra.mxu0 0.0
        %978 = vmatprep.subr.mxu0 0.0
        %979 = vmatpush1.msra.mxu0 0.0
        %980 = vmatprep.subr.mxu0 0.0
        %981 = vmatpush1.msra.mxu0 0.0
        %982 = vmatprep.subr.mxu0 0.0
        %983 = vmatpush1.msra.mxu0 0.0
        %984 = vmatprep.subr.mxu0 0.0
        %985 = vmatpush1.msra.mxu0 0.0
        %986 = vmatprep.subr.mxu0 0.0
        %987 = vmatpush1.msra.mxu0 0.0
        %988 = vmatprep.subr.mxu0 0.0
        %989 = vmatpush1.msra.mxu0 0.0
        %990 = vmatprep.subr.mxu0 0.0
        %991 = vmatpush1.msra.mxu0 0.0
        %992 = vmatprep.subr.mxu0 0.0
        %993 = vmatpush1.msra.mxu0 0.0
        %994 = vmatprep.subr.mxu0 0.0
        %995 = vmatpush1.msra.mxu0 0.0
        %996 = vmatprep.subr.mxu0 0.0
        %997 = vmatpush1.msra.mxu0 0.0
        %998 = vmatprep.subr.mxu0 0.0
        %999 = vmatpush1.msra.mxu0 0.0
        %1000 = vmatprep.subr.mxu0 0.0
        %1001 = vmatpush1.msra.mxu0 0.0
        %1002 = vmatprep.subr.mxu0 0.0
        %1003 = vmatpush1.msra.mxu0 0.0
        %1004 = vmatprep.subr.mxu0 0.0
        %1005 = vmatpush1.msra.mxu0 0.0
        %1006 = vmatprep.subr.mxu0 0.0
        %1007 = vmatpush1.msra.mxu0 0.0
        %1008 = vmatprep.subr.mxu0 0.0
        %1009 = vmatpush1.msra.mxu0 0.0
        %1010 = vmatprep.subr.mxu0 0.0
        %1011 = vmatpush1.msra.mxu0 0.0
        %1012 = vmatprep.subr.mxu0 0.0
        %1013 = vmatpush1.msra.mxu0 0.0
        %1014 = vmatprep.subr.mxu0 0.0
        %1015 = vmatpush1.msra.mxu0 0.0
        %1016 = vmatprep.mubr.f32.mxu0 0.0
        %1017 = vmatmul.mubr.f32.gmra.mrb[0].mxu0 %v947
        %v1018 = vpop.f32.mrb[0].mxu0
        %v1019 = vadd.f32 %v944, %v1018
        %v1020 = vpop.f32.mrb[0].mxu0
        %1021 = vmatprep.mubr.f32.mxu0 0.0
        %1022 = vmatmul.mubr.f32.gmra.mrb[0].mxu0 %v950
        %v1023 = vpop.f32.mrb[0].mxu0
        %v1024 = vadd.f32 %v944, %v1023
        %v1025 = vpop.f32.mrb[0].mxu0
        %1026 = vdwg.mxu0
        %v1027 = vld [vmem:[%s7] sm:$0xff]
        %v1028 = vld [vmem:[%s7 + $0x8] sm:$0xff]
        %v1029 = vld [vmem:[%s7 + $0x10] sm:$0xff]
        %v1030 = vld [vmem:[%s7 + $0x18] sm:$0xff]
        %v1031 = vld [vmem:[%s9] sm:$0x1]
        %v1033 = vlaneseq
        %v1034 = vshrl.u32 %v1033, 7
        %v1035 = vsub.s32 0, %v1034
        %v1036 = vrot.slane %v1031, %v1035
        %1038 = vmatprep.subr.mxu0 0.0
        %1039 = vmatpush1.msra.mxu0 %v1027
        %1040 = vmatprep.subr.mxu0 0.0
        %1041 = vmatpush1.msra.mxu0 %v1028
        %1042 = vmatprep.subr.mxu0 0.0
        %1043 = vmatpush1.msra.mxu0 %v1029
        %1044 = vmatprep.subr.mxu0 0.0
        %1045 = vmatpush1.msra.mxu0 %v1030
        %1046 = vmatprep.subr.mxu0 0.0
        %1047 = vmatpush1.msra.mxu0 0.0
        %1048 = vmatprep.subr.mxu0 0.0
        %1049 = vmatpush1.msra.mxu0 0.0
        %1050 = vmatprep.subr.mxu0 0.0
        %1051 = vmatpush1.msra.mxu0 0.0
        %1052 = vmatprep.subr.mxu0 0.0
        %1053 = vmatpush1.msra.mxu0 0.0
        %1054 = vmatprep.subr.mxu0 0.0
        %1055 = vmatpush1.msra.mxu0 0.0
        %1056 = vmatprep.subr.mxu0 0.0
        %1057 = vmatpush1.msra.mxu0 0.0
        %1058 = vmatprep.subr.mxu0 0.0
        %1059 = vmatpush1.msra.mxu0 0.0
        %1060 = vmatprep.subr.mxu0 0.0
        %1061 = vmatpush1.msra.mxu0 0.0
        %1062 = vmatprep.subr.mxu0 0.0
        %1063 = vmatpush1.msra.mxu0 0.0
        %1064 = vmatprep.subr.mxu0 0.0
        %1065 = vmatpush1.msra.mxu0 0.0
        %1066 = vmatprep.subr.mxu0 0.0
        %1067 = vmatpush1.msra.mxu0 0.0
        %1068 = vmatprep.subr.mxu0 0.0
        %1069 = vmatpush1.msra.mxu0 0.0
        %1070 = vmatprep.subr.mxu0 0.0
        %1071 = vmatpush1.msra.mxu0 0.0
        %1072 = vmatprep.subr.mxu0 0.0
        %1073 = vmatpush1.msra.mxu0 0.0
        %1074 = vmatprep.subr.mxu0 0.0
        %1075 = vmatpush1.msra.mxu0 0.0
        %1076 = vmatprep.subr.mxu0 0.0
        %1077 = vmatpush1.msra.mxu0 0.0
        %1078 = vmatprep.subr.mxu0 0.0
        %1079 = vmatpush1.msra.mxu0 0.0
        %1080 = vmatprep.subr.mxu0 0.0
        %1081 = vmatpush1.msra.mxu0 0.0
        %1082 = vmatprep.subr.mxu0 0.0
        %1083 = vmatpush1.msra.mxu0 0.0
        %1084 = vmatprep.subr.mxu0 0.0
        %1085 = vmatpush1.msra.mxu0 0.0
        %1086 = vmatprep.subr.mxu0 0.0
        %1087 = vmatpush1.msra.mxu0 0.0
        %1088 = vmatprep.subr.mxu0 0.0
        %1089 = vmatpush1.msra.mxu0 0.0
        %1090 = vmatprep.subr.mxu0 0.0
        %1091 = vmatpush1.msra.mxu0 0.0
        %1092 = vmatprep.subr.mxu0 0.0
        %1093 = vmatpush1.msra.mxu0 0.0
        %1094 = vmatprep.subr.mxu0 0.0
        %1095 = vmatpush1.msra.mxu0 0.0
        %1096 = vmatprep.subr.mxu0 0.0
        %1097 = vmatpush1.msra.mxu0 0.0
        %1098 = vmatprep.subr.mxu0 0.0
        %1099 = vmatpush1.msra.mxu0 0.0
        %1100 = vmatprep.subr.mxu0 0.0
        %1101 = vmatpush1.msra.mxu0 0.0
        %1102 = vmatprep.mubr.f32.mxu0 0.0
        %1103 = vmatmul.mubr.f32.gmra.mrb[0].mxu0 %v947
        %v1104 = vpop.f32.mrb[0].mxu0
        %v1105 = vadd.f32 %v1036, %v1104
        %v1106 = vpop.f32.mrb[0].mxu0
        %1107 = vmatprep.mubr.f32.mxu0 0.0
        %1108 = vmatmul.mubr.f32.gmra.mrb[0].mxu0 %v950
        %v1109 = vpop.f32.mrb[0].mxu0
        %v1110 = vadd.f32 %v1036, %v1109
        %v1111 = vpop.f32.mrb[0].mxu0
        %1112 = vdwg.mxu0
        %vm1113 = vcmask 130048
        %1114 = vst.msk [vmem:[%s417] sm:$0xff] %vm1113, %v1019
        %1115 = vst.msk [vmem:[%s417 + $0x8] sm:$0xff] %vm1113, %v1024
        %1118 = vrot.lane.b32.xlu0 %v542, 96
        %v1119 = vpop.permute.xlu0 %1118
        %1120 = vrot.lane.b32.xlu0 %v547, 96
        %v1121 = vpop.permute.xlu0 %1120
        %v1124 = vmul.f32 %v1105, %v1119
        %v1125 = vmul.f32 %v1110, %v1121
        %1126 = vst.msk [vmem:[%s423] sm:$0xff] %vm1113, %v1124
        %1127 = vst.msk [vmem:[%s423 + $0x8] sm:$0xff] %vm1113, %v1125
        %1130 = vrot.lane.b32.xlu0 %v627, 96
        %v1131 = vpop.permute.xlu0 %1130
        %1132 = vrot.lane.b32.xlu0 %v632, 96
        %v1133 = vpop.permute.xlu0 %1132
        %v1136 = vmul.f32 %v1105, %v1131
        %v1137 = vmul.f32 %v1110, %v1133
        %1140 = vrot.lane.b32.xlu0 %v1136, 16
        %v1141 = vpop.permute.xlu0 %1140
        %1142 = vrot.lane.b32.xlu0 %v1137, 16
        %v1143 = vpop.permute.xlu0 %1142
        %vm1146 = vcmask 261248
        %1147 = vst.msk [vmem:[%s423] sm:$0xff] %vm1146, %v1141
        %1148 = vst.msk [vmem:[%s423 + $0x8] sm:$0xff] %vm1146, %v1143
        %1151 = vrot.lane.b32.xlu0 %v714, 96
        %v1152 = vpop.permute.xlu0 %1151
        %1153 = vrot.lane.b32.xlu0 %v719, 96
        %v1154 = vpop.permute.xlu0 %1153
        %v1157 = vmul.f32 %v1105, %v1152
        %v1158 = vmul.f32 %v1110, %v1154
        %1161 = vrot.lane.b32.xlu0 %v1157, 32
        %v1162 = vpop.permute.xlu0 %1161
        %1163 = vrot.lane.b32.xlu0 %v1158, 32
        %v1164 = vpop.permute.xlu0 %1163
        %vm1167 = vcmask 392448
        %1168 = vst.msk [vmem:[%s423] sm:$0xff] %vm1167, %v1162
        %1169 = vst.msk [vmem:[%s423 + $0x8] sm:$0xff] %vm1167, %v1164
        %s1170 = sand.u32 %s251, 1
        %s1171 = sand.u32 %s251, 1
        %s1172 = smul.addr %s1171, 16
        %s1173 = scalar_lea.vmem [#allocation2], %s1172
        %s1174 = sand.u32 %s277, 1
        %s1175 = sand.u32 %s277, 1
        %s1176 = smul.addr %s1175, 16
        %s1177 = scalar_lea.vmem [#allocation3], %s1176
        // Predicated region
        $region61: #{tpu_custom_call.1} parent=59 // pred_check
          %p1178 = pneg %p261
        $region62: #{tpu_custom_call.1} parent=59 // pred_check_branch
          %1180 = sbr.rel (%p1178) target = $region64
        $region63: #{tpu_custom_call.1} parent=59 // pred_region
          %s1181 = smul.u32 2, %s23
          %s1182 = ssub.s32 9, %s1181
          %p1183 = scmp.lt.s32.totalorder %s1182, 2
          %s1184 = scalar_select %p1183, %s1182, 2
          %s1185 = smul.u32 128, %s1184
          %p1186 = scmp.ne.s32.totalorder 0, %s1185
          %s1187 = smul.addr %s1181, 8
          %s1188 = scalar_lea.vmem %s10, %s1187
          // Predicated region
          $region65: #{tpu_custom_call.1} parent=63 // pred_check
            %p1189 = pneg %p1186
          $region66: #{tpu_custom_call.1} parent=63 // pred_check_branch
            %1191 = sbr.rel (%p1189) target = $region68
          $region67: #{tpu_custom_call.1} parent=63 // pred_region
            // Predicated region
            $region69: #{tpu_custom_call.1} parent=67 // pred_check
              _
            $region70: #{tpu_custom_call.1} parent=67 // pred_check_branch
              %1193 = sbr.rel (0) target = $region72
            $region71: #{tpu_custom_call.1} parent=67 // pred_region
              // Predicated region
              $region91: #{tpu_custom_call.1} parent=71 // pred_check
                _
              $region92: #{tpu_custom_call.1} parent=71 // pred_check_branch
                %1244 = sbr.rel (0) target = $region94
              $region93: #{tpu_custom_call.1} parent=71 // pred_region
                %s1245 = sshrl.u32 %s1184, 1
                // While loop
                $region95: #{tpu_custom_call.1} parent=93 // loop_pre_header
                  _
                $region96: #{tpu_custom_call.1} parent=93 // loop_header
                  %s1247 = sphi 0, %s1249
                  %p1248 = scmp.ge.s32.totalorder %s1247, %s1245
                  %s1252 = sphi 0, %s1261
                  %s1253 = sphi %s1173, %s1264
                  %s1254 = sphi %s1188, %s1265
                $region97: #{tpu_custom_call.1} parent=93 // loop_header_branch
                  %1251 = sbr.rel (%p1248) target = $region101
                $region98: #{tpu_custom_call.1} parent=93 // loop_body
                  %v1255 = vld [vmem:[%s1253] sm:$0xff]
                  %1256 = vst [vmem:[%s1254] sm:$0xff] %v1255
                  %v1257 = vld [vmem:[%s1253 + $0x8] sm:$0xff]
                  %1258 = vst [vmem:[%s1254 + $0x8] sm:$0xff] %v1257
                  %s1259 = sadd.s32 1, %s1252
                  %p1260 = scmp.ge.s32.totalorder %s1259, %s1245
                  %s1261 = scalar_select %p1260, 0, %s1259
                  %s1262 = smul.u32 %s1261, 16
                  %s1263 = smul.u32 %s1261, 16
                  %s1264 = scalar_lea.vmem %s1173, %s1262 [#allocation2]
                  %s1265 = scalar_lea.vmem %s1188, %s1263
                $region99: #{tpu_custom_call.1} parent=93 // loop_footer
                  %s1249 = sadd.s32 %s1247, 1
                $region100: #{tpu_custom_call.1} parent=93 // loop_footer_branch
                  %1246 = sbr.rel target = $region96
                $region101: #{tpu_custom_call.1} parent=93 // loop_exit
                  _
                %s1266 = sshrl.u32 %s1184, 1
                %s1267 = sand.u32 %s1184, 1
                %s1268 = smul.u32 %s1266, 2
                %s1269 = smul.u32 8, %s1268
                %s1270 = scalar_lea.vmem %s1173, %s1269 [#allocation2]
                %s1271 = smul.u32 8, %s1268
                %s1272 = scalar_lea.vmem %s1188, %s1271
                // While loop
                $region102: #{tpu_custom_call.1} parent=93 // loop_pre_header
                  _
                $region103: #{tpu_custom_call.1} parent=93 // loop_header
                  %s1274 = sphi 0, %s1276
                  %p1275 = scmp.ge.s32.totalorder %s1274, %s1267
                  %s1279 = sphi 0, %s1286
                  %s1280 = sphi %s1270, %s1289
                  %s1281 = sphi %s1272, %s1290
                $region104: #{tpu_custom_call.1} parent=93 // loop_header_branch
                  %1278 = sbr.rel (%p1275) target = $region108
                $region105: #{tpu_custom_call.1} parent=93 // loop_body
                  %v1282 = vld [vmem:[%s1280] sm:$0xff]
                  %1283 = vst [vmem:[%s1281] sm:$0xff] %v1282
                  %s1284 = sadd.s32 1, %s1279
                  %p1285 = scmp.ge.s32.totalorder %s1284, %s1267
                  %s1286 = scalar_select %p1285, 0, %s1284
                  %s1287 = smul.u32 %s1286, 8
                  %s1288 = smul.u32 %s1286, 8
                  %s1289 = scalar_lea.vmem %s1270, %s1287 [#allocation2]
                  %s1290 = scalar_lea.vmem %s1272, %s1288
                $region106: #{tpu_custom_call.1} parent=93 // loop_footer
                  %s1276 = sadd.s32 %s1274, 1
                $region107: #{tpu_custom_call.1} parent=93 // loop_footer_branch
                  %1273 = sbr.rel target = $region103
                $region108: #{tpu_custom_call.1} parent=93 // loop_exit
                  _
              $region94: #{tpu_custom_call.1} parent=71 // pred_fallthru
                _
              // Predicated region
              $region109: #{tpu_custom_call.1} parent=71 // pred_check
                _
              $region110: #{tpu_custom_call.1} parent=71 // pred_check_branch
                %1292 = sbr.rel target = $region112
              $region111: #{tpu_custom_call.1} parent=71 // pred_region
                _
              $region112: #{tpu_custom_call.1} parent=71 // pred_fallthru
                _
            $region72: #{tpu_custom_call.1} parent=67 // pred_fallthru
              _
            // Predicated region
            $region73: #{tpu_custom_call.1} parent=67 // pred_check
              _
            $region74: #{tpu_custom_call.1} parent=67 // pred_check_branch
              %1195 = sbr.rel target = $region76
            $region75: #{tpu_custom_call.1} parent=67 // pred_region
              %s1197 = sshrl.u32 %s1184, 1
              // While loop
              $region77: #{tpu_custom_call.1} parent=75 // loop_pre_header
                _
              $region78: #{tpu_custom_call.1} parent=75 // loop_header
                %s1199 = sphi 0, %s1201
                %p1200 = scmp.ge.s32.totalorder %s1199, %s1197
                %s1204 = sphi 0, %s1213
                %s1205 = sphi %s1173, %s1216
                %s1206 = sphi %s1188, %s1217
              $region79: #{tpu_custom_call.1} parent=75 // loop_header_branch
                %1203 = sbr.rel (%p1200) target = $region83
              $region80: #{tpu_custom_call.1} parent=75 // loop_body
                %v1207 = vld [vmem:[%s1205] sm:$0xff]
                %1208 = vst [vmem:[%s1206] sm:$0xff] %v1207
                %v1209 = vld [vmem:[%s1205 + $0x8] sm:$0xff]
                %1210 = vst [vmem:[%s1206 + $0x8] sm:$0xff] %v1209
                %s1211 = sadd.s32 1, %s1204
                %p1212 = scmp.ge.s32.totalorder %s1211, %s1197
                %s1213 = scalar_select %p1212, 0, %s1211
                %s1214 = smul.u32 %s1213, 16
                %s1215 = smul.u32 %s1213, 16
                %s1216 = scalar_lea.vmem %s1173, %s1214 [#allocation2]
                %s1217 = scalar_lea.vmem %s1188, %s1215
              $region81: #{tpu_custom_call.1} parent=75 // loop_footer
                %s1201 = sadd.s32 %s1199, 1
              $region82: #{tpu_custom_call.1} parent=75 // loop_footer_branch
                %1198 = sbr.rel target = $region78
              $region83: #{tpu_custom_call.1} parent=75 // loop_exit
                _
              %s1218 = sshrl.u32 %s1184, 1
              %s1219 = sand.u32 %s1184, 1
              %s1220 = smul.u32 %s1218, 2
              %s1221 = smul.u32 8, %s1220
              %s1222 = scalar_lea.vmem %s1173, %s1221 [#allocation2]
              %s1223 = smul.u32 8, %s1220
              %s1224 = scalar_lea.vmem %s1188, %s1223
              // While loop
              $region84: #{tpu_custom_call.1} parent=75 // loop_pre_header
                _
              $region85: #{tpu_custom_call.1} parent=75 // loop_header
                %s1226 = sphi 0, %s1228
                %p1227 = scmp.ge.s32.totalorder %s1226, %s1219
                %s1231 = sphi 0, %s1238
                %s1232 = sphi %s1222, %s1241
                %s1233 = sphi %s1224, %s1242
              $region86: #{tpu_custom_call.1} parent=75 // loop_header_branch
                %1230 = sbr.rel (%p1227) target = $region90
              $region87: #{tpu_custom_call.1} parent=75 // loop_body
                %v1234 = vld [vmem:[%s1232] sm:$0xff]
                %1235 = vst [vmem:[%s1233] sm:$0xff] %v1234
                %s1236 = sadd.s32 1, %s1231
                %p1237 = scmp.ge.s32.totalorder %s1236, %s1219
                %s1238 = scalar_select %p1237, 0, %s1236
                %s1239 = smul.u32 %s1238, 8
                %s1240 = smul.u32 %s1238, 8
                %s1241 = scalar_lea.vmem %s1222, %s1239 [#allocation2]
                %s1242 = scalar_lea.vmem %s1224, %s1240
              $region88: #{tpu_custom_call.1} parent=75 // loop_footer
                %s1228 = sadd.s32 %s1226, 1
              $region89: #{tpu_custom_call.1} parent=75 // loop_footer_branch
                %1225 = sbr.rel target = $region85
              $region90: #{tpu_custom_call.1} parent=75 // loop_exit
                _
            $region76: #{tpu_custom_call.1} parent=67 // pred_fallthru
              _
          $region68: #{tpu_custom_call.1} parent=63 // pred_fallthru
            _
          %1293 = vnop
        $region64: #{tpu_custom_call.1} parent=59 // pred_fallthru
          _
        // Predicated region
        $region113: #{tpu_custom_call.1} parent=59 // pred_check
          %p1294 = pneg %p287
        $region114: #{tpu_custom_call.1} parent=59 // pred_check_branch
          %1296 = sbr.rel (%p1294) target = $region116
        $region115: #{tpu_custom_call.1} parent=59 // pred_region
          %s1297 = smul.u32 2, %s23
          %s1298 = ssub.s32 9, %s1297
          %p1299 = scmp.lt.s32.totalorder %s1298, 2
          %s1300 = scalar_select %p1299, %s1298, 2
          %s1301 = smul.u32 128, %s1300
          %p1302 = scmp.ne.s32.totalorder 0, %s1301
          %s1303 = smul.addr %s1297, 8
          %s1304 = scalar_lea.vmem %s11, %s1303
          // Predicated region
          $region117: #{tpu_custom_call.1} parent=115 // pred_check
            %p1305 = pneg %p1302
          $region118: #{tpu_custom_call.1} parent=115 // pred_check_branch
            %1307 = sbr.rel (%p1305) target = $region120
          $region119: #{tpu_custom_call.1} parent=115 // pred_region
            // Predicated region
            $region121: #{tpu_custom_call.1} parent=119 // pred_check
              _
            $region122: #{tpu_custom_call.1} parent=119 // pred_check_branch
              %1309 = sbr.rel (0) target = $region124
            $region123: #{tpu_custom_call.1} parent=119 // pred_region
              // Predicated region
              $region143: #{tpu_custom_call.1} parent=123 // pred_check
                _
              $region144: #{tpu_custom_call.1} parent=123 // pred_check_branch
                %1360 = sbr.rel (0) target = $region146
              $region145: #{tpu_custom_call.1} parent=123 // pred_region
                %s1361 = sshrl.u32 %s1300, 1
                // While loop
                $region147: #{tpu_custom_call.1} parent=145 // loop_pre_header
                  _
                $region148: #{tpu_custom_call.1} parent=145 // loop_header
                  %s1363 = sphi 0, %s1365
                  %p1364 = scmp.ge.s32.totalorder %s1363, %s1361
                  %s1368 = sphi 0, %s1377
                  %s1369 = sphi %s1177, %s1380
                  %s1370 = sphi %s1304, %s1381
                $region149: #{tpu_custom_call.1} parent=145 // loop_header_branch
                  %1367 = sbr.rel (%p1364) target = $region153
                $region150: #{tpu_custom_call.1} parent=145 // loop_body
                  %v1371 = vld [vmem:[%s1369] sm:$0xff]
                  %1372 = vst [vmem:[%s1370] sm:$0xff] %v1371
                  %v1373 = vld [vmem:[%s1369 + $0x8] sm:$0xff]
                  %1374 = vst [vmem:[%s1370 + $0x8] sm:$0xff] %v1373
                  %s1375 = sadd.s32 1, %s1368
                  %p1376 = scmp.ge.s32.totalorder %s1375, %s1361
                  %s1377 = scalar_select %p1376, 0, %s1375
                  %s1378 = smul.u32 %s1377, 16
                  %s1379 = smul.u32 %s1377, 16
                  %s1380 = scalar_lea.vmem %s1177, %s1378 [#allocation3]
                  %s1381 = scalar_lea.vmem %s1304, %s1379
                $region151: #{tpu_custom_call.1} parent=145 // loop_footer
                  %s1365 = sadd.s32 %s1363, 1
                $region152: #{tpu_custom_call.1} parent=145 // loop_footer_branch
                  %1362 = sbr.rel target = $region148
                $region153: #{tpu_custom_call.1} parent=145 // loop_exit
                  _
                %s1382 = sshrl.u32 %s1300, 1
                %s1383 = sand.u32 %s1300, 1
                %s1384 = smul.u32 %s1382, 2
                %s1385 = smul.u32 8, %s1384
                %s1386 = scalar_lea.vmem %s1177, %s1385 [#allocation3]
                %s1387 = smul.u32 8, %s1384
                %s1388 = scalar_lea.vmem %s1304, %s1387
                // While loop
                $region154: #{tpu_custom_call.1} parent=145 // loop_pre_header
                  _
                $region155: #{tpu_custom_call.1} parent=145 // loop_header
                  %s1390 = sphi 0, %s1392
                  %p1391 = scmp.ge.s32.totalorder %s1390, %s1383
                  %s1395 = sphi 0, %s1402
                  %s1396 = sphi %s1386, %s1405
                  %s1397 = sphi %s1388, %s1406
                $region156: #{tpu_custom_call.1} parent=145 // loop_header_branch
                  %1394 = sbr.rel (%p1391) target = $region160
                $region157: #{tpu_custom_call.1} parent=145 // loop_body
                  %v1398 = vld [vmem:[%s1396] sm:$0xff]
                  %1399 = vst [vmem:[%s1397] sm:$0xff] %v1398
                  %s1400 = sadd.s32 1, %s1395
                  %p1401 = scmp.ge.s32.totalorder %s1400, %s1383
                  %s1402 = scalar_select %p1401, 0, %s1400
                  %s1403 = smul.u32 %s1402, 8
                  %s1404 = smul.u32 %s1402, 8
                  %s1405 = scalar_lea.vmem %s1386, %s1403 [#allocation3]
                  %s1406 = scalar_lea.vmem %s1388, %s1404
                $region158: #{tpu_custom_call.1} parent=145 // loop_footer
                  %s1392 = sadd.s32 %s1390, 1
                $region159: #{tpu_custom_call.1} parent=145 // loop_footer_branch
                  %1389 = sbr.rel target = $region155
                $region160: #{tpu_custom_call.1} parent=145 // loop_exit
                  _
              $region146: #{tpu_custom_call.1} parent=123 // pred_fallthru
                _
              // Predicated region
              $region161: #{tpu_custom_call.1} parent=123 // pred_check
                _
              $region162: #{tpu_custom_call.1} parent=123 // pred_check_branch
                %1408 = sbr.rel target = $region164
              $region163: #{tpu_custom_call.1} parent=123 // pred_region
                _
              $region164: #{tpu_custom_call.1} parent=123 // pred_fallthru
                _
            $region124: #{tpu_custom_call.1} parent=119 // pred_fallthru
              _
            // Predicated region
            $region125: #{tpu_custom_call.1} parent=119 // pred_check
              _
            $region126: #{tpu_custom_call.1} parent=119 // pred_check_branch
              %1311 = sbr.rel target = $region128
            $region127: #{tpu_custom_call.1} parent=119 // pred_region
              %s1313 = sshrl.u32 %s1300, 1
              // While loop
              $region129: #{tpu_custom_call.1} parent=127 // loop_pre_header
                _
              $region130: #{tpu_custom_call.1} parent=127 // loop_header
                %s1315 = sphi 0, %s1317
                %p1316 = scmp.ge.s32.totalorder %s1315, %s1313
                %s1320 = sphi 0, %s1329
                %s1321 = sphi %s1177, %s1332
                %s1322 = sphi %s1304, %s1333
              $region131: #{tpu_custom_call.1} parent=127 // loop_header_branch
                %1319 = sbr.rel (%p1316) target = $region135
              $region132: #{tpu_custom_call.1} parent=127 // loop_body
                %v1323 = vld [vmem:[%s1321] sm:$0xff]
                %1324 = vst [vmem:[%s1322] sm:$0xff] %v1323
                %v1325 = vld [vmem:[%s1321 + $0x8] sm:$0xff]
                %1326 = vst [vmem:[%s1322 + $0x8] sm:$0xff] %v1325
                %s1327 = sadd.s32 1, %s1320
                %p1328 = scmp.ge.s32.totalorder %s1327, %s1313
                %s1329 = scalar_select %p1328, 0, %s1327
                %s1330 = smul.u32 %s1329, 16
                %s1331 = smul.u32 %s1329, 16
                %s1332 = scalar_lea.vmem %s1177, %s1330 [#allocation3]
                %s1333 = scalar_lea.vmem %s1304, %s1331
              $region133: #{tpu_custom_call.1} parent=127 // loop_footer
                %s1317 = sadd.s32 %s1315, 1
              $region134: #{tpu_custom_call.1} parent=127 // loop_footer_branch
                %1314 = sbr.rel target = $region130
              $region135: #{tpu_custom_call.1} parent=127 // loop_exit
                _
              %s1334 = sshrl.u32 %s1300, 1
              %s1335 = sand.u32 %s1300, 1
              %s1336 = smul.u32 %s1334, 2
              %s1337 = smul.u32 8, %s1336
              %s1338 = scalar_lea.vmem %s1177, %s1337 [#allocation3]
              %s1339 = smul.u32 8, %s1336
              %s1340 = scalar_lea.vmem %s1304, %s1339
              // While loop
              $region136: #{tpu_custom_call.1} parent=127 // loop_pre_header
                _
              $region137: #{tpu_custom_call.1} parent=127 // loop_header
                %s1342 = sphi 0, %s1344
                %p1343 = scmp.ge.s32.totalorder %s1342, %s1335
                %s1347 = sphi 0, %s1354
                %s1348 = sphi %s1338, %s1357
                %s1349 = sphi %s1340, %s1358
              $region138: #{tpu_custom_call.1} parent=127 // loop_header_branch
                %1346 = sbr.rel (%p1343) target = $region142
              $region139: #{tpu_custom_call.1} parent=127 // loop_body
                %v1350 = vld [vmem:[%s1348] sm:$0xff]
                %1351 = vst [vmem:[%s1349] sm:$0xff] %v1350
                %s1352 = sadd.s32 1, %s1347
                %p1353 = scmp.ge.s32.totalorder %s1352, %s1335
                %s1354 = scalar_select %p1353, 0, %s1352
                %s1355 = smul.u32 %s1354, 8
                %s1356 = smul.u32 %s1354, 8
                %s1357 = scalar_lea.vmem %s1338, %s1355 [#allocation3]
                %s1358 = scalar_lea.vmem %s1340, %s1356
              $region140: #{tpu_custom_call.1} parent=127 // loop_footer
                %s1344 = sadd.s32 %s1342, 1
              $region141: #{tpu_custom_call.1} parent=127 // loop_footer_branch
                %1341 = sbr.rel target = $region137
              $region142: #{tpu_custom_call.1} parent=127 // loop_exit
                _
            $region128: #{tpu_custom_call.1} parent=119 // pred_fallthru
              _
          $region120: #{tpu_custom_call.1} parent=115 // pred_fallthru
            _
          %1409 = vnop
        $region116: #{tpu_custom_call.1} parent=59 // pred_fallthru
          _
      $region60: #{tpu_custom_call.1} parent=5 // pred_fallthru
        _
      %p1410 = scmp.le.s32.totalorder 2, %s18
      // Predicated region
      $region165: #{tpu_custom_call.1} parent=5 // pred_check
        %p1411 = pneg %p1410
      $region166: #{tpu_custom_call.1} parent=5 // pred_check_branch
        %1413 = sbr.rel (%p1411) target = $region168
      $region167: #{tpu_custom_call.1} parent=5 // pred_region
        %s1414 = ssub.s32 %s18, 2
        // Predicated region
        $region169: #{tpu_custom_call.1} parent=167 // pred_check
          %p1415 = pneg %p267
        $region170: #{tpu_custom_call.1} parent=167 // pred_check_branch
          %1417 = sbr.rel (%p1415) target = $region172
        $region171: #{tpu_custom_call.1} parent=167 // pred_region
          %s1418 = sand.u32 %s252, 1
          %s1419 = sand.u32 %s252, 1
          %s1420 = smul.addr %s1419, 16
          %s1421 = scalar_lea.vmem [#allocation2], %s1420
        $region172: #{tpu_custom_call.1} parent=167 // pred_fallthru
          _
        // Predicated region
        $region173: #{tpu_custom_call.1} parent=167 // pred_check
          %p1422 = pneg %p293
        $region174: #{tpu_custom_call.1} parent=167 // pred_check_branch
          %1424 = sbr.rel (%p1422) target = $region176
        $region175: #{tpu_custom_call.1} parent=167 // pred_region
          %s1425 = sand.u32 %s278, 1
          %s1426 = sand.u32 %s278, 1
          %s1427 = smul.addr %s1426, 16
          %s1428 = scalar_lea.vmem [#allocation3], %s1427
        $region176: #{tpu_custom_call.1} parent=167 // pred_fallthru
          _
      $region168: #{tpu_custom_call.1} parent=5 // pred_fallthru
        _
    $region6: #{tpu_custom_call.1} parent=1 // loop_footer
      %s22 = sadd.s32 1, %s18
    $region7: #{tpu_custom_call.1} parent=1 // loop_footer_branch
      %17 = sbr.rel target = $region3
    $region8: #{tpu_custom_call.1} parent=1 // loop_exit
      _

</llo_original>
